<compile_context>
chip_gen: v7x
topology: tpu7x:2x2x1
jax: 0.10.0
libtpu: 0.0.40
codegen_flags: <defaults>
</compile_context>

<pallas_src>
import jax
import jax.numpy as jnp
import numpy as np
from jax.experimental import pallas as pl
from jax.experimental.pallas import tpu as pltpu


def _store_padded(pad_ref, x):
    """Write `x` (Hp, Wp, C) into the interior of `pad_ref` (Hp+2, Wp+2, C)
    and clear only the 1-wide halo ring (not the whole buffer)."""
    Hp, Wp = x.shape[0], x.shape[1]
    C = pad_ref.shape[-1]
    zrow = jnp.zeros((1, Wp + 2, C), pad_ref.dtype)
    zcol = jnp.zeros((Hp + 2, 1, C), pad_ref.dtype)
    pad_ref[0:1, :, :] = zrow                      # top halo row
    pad_ref[Hp + 1:Hp + 2, :, :] = zrow            # bottom halo row
    pad_ref[:, 0:1, :] = zcol                      # left halo column
    pad_ref[:, Wp + 1:Wp + 2, :] = zcol            # right halo column
    pad_ref[1:Hp + 1, 1:Wp + 1, :] = x.astype(pad_ref.dtype)


def _conv3x3_relu(pad_ref, w_ref, b_ref, Hp, Wp):
    """3x3 'SAME' conv + bias + ReLU as ONE matmul with K = 9*C_in.

    pad_ref: (Hp+2, Wp+2, C_in) zero-padded feature map in VMEM
    w_ref  : (9*C_in, C_out), rows ordered (kh, kw, c_in)
    b_ref  : (1, C_out)
    returns: (Hp*Wp, C_out) float32
    """
    C = pad_ref.shape[-1]
    taps = []
    for kh in range(3):
        for kw in range(3):
            # Static slices of the VMEM scratch; the (Hp, Wp, C) -> (Hp*Wp, C)
            # reshape merges major dims only (layout-preserving).
            taps.append(pad_ref[kh:kh + Hp, kw:kw + Wp, :].reshape(Hp * Wp, C))
    patches = jnp.concatenate(taps, axis=-1)                 # (Hp*Wp, 9*C)
    acc = jnp.dot(patches, w_ref[...], preferred_element_type=jnp.float32)
    return jnp.maximum(acc + b_ref[...], 0.0)


def down_kernel(x_ref, w1_ref, b1_ref, w2_ref, b2_ref, out_ref,
                pad1_ref, pad2_ref):
    """Fused maxpool(2) + conv3x3+ReLU + conv3x3+ReLU for one batch element.

    x_ref  : (1, H, W, Cin)        NHWC input block
    w*_ref : (9*Cin, Cout)         im2col-folded conv weights
    b*_ref : (1, Cout)
    out_ref: (1, Hp, Wp, Cout)
    pad*   : (Hp+2, Wp+2, C) VMEM scratch (zero-padded feature maps)
    """
    H, W, Cin = x_ref.shape[1], x_ref.shape[2], x_ref.shape[3]
    Hp, Wp = H // 2, W // 2
    Cmid = w1_ref.shape[1]
    Cout = w2_ref.shape[1]

    # ---- MaxPool2d(2): strided reads of the four 2x2-window elements ------
    xv = x_ref.at[0]                                         # (H, W, Cin) view
    p00 = xv[pl.ds(0, Hp, 2), pl.ds(0, Wp, 2), :]
    p01 = xv[pl.ds(0, Hp, 2), pl.ds(1, Wp, 2), :]
    p10 = xv[pl.ds(1, Hp, 2), pl.ds(0, Wp, 2), :]
    p11 = xv[pl.ds(1, Hp, 2), pl.ds(1, Wp, 2), :]
    pooled = jnp.maximum(jnp.maximum(p00, p01), jnp.maximum(p10, p11))

    # ---- conv1 (3x3, pad=1) + bias + ReLU ---------------------------------
    _store_padded(pad1_ref, pooled)
    h1 = _conv3x3_relu(pad1_ref, w1_ref, b1_ref, Hp, Wp)     # (Hp*Wp, Cmid)

    # ---- conv2 (3x3, pad=1) + bias + ReLU ---------------------------------
    _store_padded(pad2_ref, h1.reshape(Hp, Wp, Cmid))
    h2 = _conv3x3_relu(pad2_ref, w2_ref, b2_ref, Hp, Wp)     # (Hp*Wp, Cout)

    out_ref[0] = h2.reshape(Hp, Wp, Cout).astype(out_ref.dtype)


@jax.jit
def down_forward(x_nchw, w1, b1, w2, b2):
    """Down(in_ch, out_ch).forward: NCHW input, PyTorch OIHW conv weights."""
    N, Cin, H, W = x_nchw.shape
    Cmid = w1.shape[0]
    Cout = w2.shape[0]
    Hp, Wp = H // 2, W // 2

    # NCHW -> NHWC (interface shim only; NHWC-native callers skip this).
    x = jnp.transpose(x_nchw, (0, 2, 3, 1))

    # OIHW -> (kh, kw, cin, cout) -> (9*cin, cout) matmul layout (done once).
    w1m = jnp.transpose(w1, (2, 3, 1, 0)).reshape(9 * Cin, Cmid)
    w2m = jnp.transpose(w2, (2, 3, 1, 0)).reshape(9 * Cmid, Cout)
    b1m = b1.reshape(1, Cmid)
    b2m = b2.reshape(1, Cout)

    out_nhwc = pl.pallas_call(
        down_kernel,
        out_shape=jax.ShapeDtypeStruct((N, Hp, Wp, Cout), x.dtype),
        grid_spec=pltpu.PrefetchScalarGridSpec(
            num_scalar_prefetch=0,
            grid=(N,),
            in_specs=[
                pl.BlockSpec((1, H, W, Cin), lambda n: (n, 0, 0, 0)),
                pl.BlockSpec((9 * Cin, Cmid), lambda n: (0, 0)),
                pl.BlockSpec((1, Cmid), lambda n: (0, 0)),
                pl.BlockSpec((9 * Cmid, Cout), lambda n: (0, 0)),
                pl.BlockSpec((1, Cout), lambda n: (0, 0)),
            ],
            out_specs=pl.BlockSpec((1, Hp, Wp, Cout), lambda n: (n, 0, 0, 0)),
            scratch_shapes=[
                pltpu.VMEM((Hp + 2, Wp + 2, Cin), jnp.float32),
                pltpu.VMEM((Hp + 2, Wp + 2, Cmid), jnp.float32),
            ],
        ),
        compiler_params=pltpu.CompilerParams(
            dimension_semantics=("parallel",),
            vmem_limit_bytes=32 * 1024 * 1024,
        ),
    )(x, w1m, b1m, w2m, b2m)

    # TODO(synk): for realistic UNet shapes (large H/W, C>=64) add a row-band
    # spatial grid axis with a 1-row halo so VMEM stays bounded on v7x (64 MiB)
    # and the second TensorCore gets work even at batch 1; optionally cast the
    # matmul operands to bf16 on v6e/v7x with f32 accumulation.
    return jnp.transpose(out_nhwc, (0, 3, 1, 2))             # NHWC -> NCHW


def ref_down(x_nchw, w1, b1, w2, b2):
    """Pure-JAX reference of the PyTorch forward pass (for verification)."""
    x = jnp.transpose(x_nchw, (0, 2, 3, 1))
    N, H, W, C = x.shape
    p = x.reshape(N, H // 2, 2, W // 2, 2, C).max(axis=(2, 4))

    def conv_relu(inp, w_oihw, b):
        w_hwio = jnp.transpose(w_oihw, (2, 3, 1, 0))
        y = jax.lax.conv_general_dilated(
            inp, w_hwio, window_strides=(1, 1), padding="SAME",
            dimension_numbers=("NHWC", "HWIO", "NHWC"))
        return jnp.maximum(y + b.reshape(1, 1, 1, -1), 0.0)

    h = conv_relu(p, w1, b1)
    h = conv_relu(h, w2, b2)
    return jnp.transpose(h, (0, 3, 1, 2))


if __name__ == "__main__":
    # Small shapes consistent with Down(in_channels=4, out_channels=8).
    N, Cin, H, W = 2, 4, 16, 16
    Cout = 8

    key = jax.random.PRNGKey(0)
    kx, k1, k2, k3, k4 = jax.random.split(key, 5)
    x = jax.random.normal(kx, (N, Cin, H, W), jnp.float32)

    # PyTorch-layout parameters: OIHW weights, (C,) biases.
    w1 = jax.random.normal(k1, (Cout, Cin, 3, 3), jnp.float32) * 0.2
    b1 = jax.random.normal(k2, (Cout,), jnp.float32) * 0.1
    w2 = jax.random.normal(k3, (Cout, Cout, 3, 3), jnp.float32) * 0.2
    b2 = jax.random.normal(k4, (Cout,), jnp.float32) * 0.1

    out = down_forward(x, w1, b1, w2, b2)
    jax.block_until_ready(out)

    assert out.shape == (N, Cout, H // 2, W // 2), out.shape
    ref = ref_down(x, w1, b1, w2, b2)
    np.testing.assert_allclose(np.asarray(out), np.asarray(ref),
                               rtol=1e-4, atol=1e-4)
    print("KERNEL_OK")
</pallas_src>

<mosaic_0001>
module attributes {stable_mosaic.version = 11 : i64} {
  func.func @down_kernel(%arg0: i32, %arg1: memref<1x16x16x4xf32, #tpu.memory_space<vmem>>, %arg2: memref<36x8xf32, #tpu.memory_space<vmem>>, %arg3: memref<1x8xf32, #tpu.memory_space<vmem>>, %arg4: memref<72x8xf32, #tpu.memory_space<vmem>>, %arg5: memref<1x8xf32, #tpu.memory_space<vmem>>, %arg6: memref<1x8x8x8xf32, #tpu.memory_space<vmem>>, %arg7: memref<10x10x4xf32, #tpu.memory_space<vmem>>, %arg8: memref<10x10x8xf32, #tpu.memory_space<vmem>>) attributes {dimension_semantics = [#tpu.dimension_semantics<parallel>], iteration_bounds = array<i64: 2>, scalar_prefetch = 0 : i64, scratch_operands = 2 : i64, tpu.core_type = #tpu.core_type<tc>, window_params = [{transform_indices = @transform_0, window_bounds = array<i64: 1, 16, 16, 4>}, {pipeline_mode = #tpu.pipeline_mode<synchronous>, transform_indices = @transform_1, window_bounds = array<i64: 36, 8>}, {pipeline_mode = #tpu.pipeline_mode<synchronous>, transform_indices = @transform_2, window_bounds = array<i64: 1, 8>}, {pipeline_mode = #tpu.pipeline_mode<synchronous>, transform_indices = @transform_3, window_bounds = array<i64: 72, 8>}, {pipeline_mode = #tpu.pipeline_mode<synchronous>, transform_indices = @transform_4, window_bounds = array<i64: 1, 8>}, {transform_indices = @transform_5, window_bounds = array<i64: 1, 8, 8, 8>}]} {
    %c0_i32 = arith.constant 0 : i32
    %c0_i32_0 = arith.constant 0 : i32
    %c0_i32_1 = arith.constant 0 : i32
    %c0_i32_2 = arith.constant 0 : i32
    %0 = tpu.memref_slice %arg1[%c0_i32, %c0_i32_0, %c0_i32_1, %c0_i32_2] : memref<1x16x16x4xf32, #tpu.memory_space<vmem>> -> memref<1x16x16x4xf32, #tpu.memory_space<vmem>>
    %1 = tpu.memref_squeeze %0 : memref<1x16x16x4xf32, #tpu.memory_space<vmem>> -> memref<16x16x4xf32, #tpu.memory_space<vmem>>
    %c0 = arith.constant 0 : index
    %c0_3 = arith.constant 0 : index
    %c0_4 = arith.constant 0 : index
    %2 = tpu.strided_load %1[%c0, %c0_3, %c0_4] {strides = array<i32: 2, 2, 1>} : memref<16x16x4xf32, #tpu.memory_space<vmem>>, vector<8x8x4xf32>
    %c0_i32_5 = arith.constant 0 : i32
    %c0_i32_6 = arith.constant 0 : i32
    %c0_i32_7 = arith.constant 0 : i32
    %c0_i32_8 = arith.constant 0 : i32
    %3 = tpu.memref_slice %arg1[%c0_i32_5, %c0_i32_6, %c0_i32_7, %c0_i32_8] : memref<1x16x16x4xf32, #tpu.memory_space<vmem>> -> memref<1x16x16x4xf32, #tpu.memory_space<vmem>>
    %4 = tpu.memref_squeeze %3 : memref<1x16x16x4xf32, #tpu.memory_space<vmem>> -> memref<16x16x4xf32, #tpu.memory_space<vmem>>
    %c0_9 = arith.constant 0 : index
    %c1 = arith.constant 1 : index
    %c0_10 = arith.constant 0 : index
    %5 = tpu.strided_load %4[%c0_9, %c1, %c0_10] {strides = array<i32: 2, 2, 1>} : memref<16x16x4xf32, #tpu.memory_space<vmem>>, vector<8x8x4xf32>
    %c0_i32_11 = arith.constant 0 : i32
    %c0_i32_12 = arith.constant 0 : i32
    %c0_i32_13 = arith.constant 0 : i32
    %c0_i32_14 = arith.constant 0 : i32
    %6 = tpu.memref_slice %arg1[%c0_i32_11, %c0_i32_12, %c0_i32_13, %c0_i32_14] : memref<1x16x16x4xf32, #tpu.memory_space<vmem>> -> memref<1x16x16x4xf32, #tpu.memory_space<vmem>>
    %7 = tpu.memref_squeeze %6 : memref<1x16x16x4xf32, #tpu.memory_space<vmem>> -> memref<16x16x4xf32, #tpu.memory_space<vmem>>
    %c1_15 = arith.constant 1 : index
    %c0_16 = arith.constant 0 : index
    %c0_17 = arith.constant 0 : index
    %8 = tpu.strided_load %7[%c1_15, %c0_16, %c0_17] {strides = array<i32: 2, 2, 1>} : memref<16x16x4xf32, #tpu.memory_space<vmem>>, vector<8x8x4xf32>
    %c0_i32_18 = arith.constant 0 : i32
    %c0_i32_19 = arith.constant 0 : i32
    %c0_i32_20 = arith.constant 0 : i32
    %c0_i32_21 = arith.constant 0 : i32
    %9 = tpu.memref_slice %arg1[%c0_i32_18, %c0_i32_19, %c0_i32_20, %c0_i32_21] : memref<1x16x16x4xf32, #tpu.memory_space<vmem>> -> memref<1x16x16x4xf32, #tpu.memory_space<vmem>>
    %10 = tpu.memref_squeeze %9 : memref<1x16x16x4xf32, #tpu.memory_space<vmem>> -> memref<16x16x4xf32, #tpu.memory_space<vmem>>
    %c1_22 = arith.constant 1 : index
    %c1_23 = arith.constant 1 : index
    %c0_24 = arith.constant 0 : index
    %11 = tpu.strided_load %10[%c1_22, %c1_23, %c0_24] {strides = array<i32: 2, 2, 1>} : memref<16x16x4xf32, #tpu.memory_space<vmem>>, vector<8x8x4xf32>
    %12 = arith.maximumf %2, %5 : vector<8x8x4xf32>
    %13 = arith.maximumf %8, %11 : vector<8x8x4xf32>
    %14 = arith.maximumf %12, %13 : vector<8x8x4xf32>
    %cst = arith.constant 0.000000e+00 : f32
    %15 = vector.broadcast %cst : f32 to vector<1x10x4xf32>
    %cst_25 = arith.constant 0.000000e+00 : f32
    %16 = vector.broadcast %cst_25 : f32 to vector<10x1x4xf32>
    %c0_26 = arith.constant 0 : index
    %c0_27 = arith.constant 0 : index
    %c0_28 = arith.constant 0 : index
    %17 = vector.load %arg7[%c0_26, %c0_27, %c0_28] : memref<10x10x4xf32, #tpu.memory_space<vmem>>, vector<1x10x4xf32>
    tpu.vector_store %arg7[%c0_26, %c0_27, %c0_28], %15 {strides = array<i32>} : memref<10x10x4xf32, #tpu.memory_space<vmem>>, vector<1x10x4xf32>,
    %c9 = arith.constant 9 : index
    %c0_29 = arith.constant 0 : index
    %c0_30 = arith.constant 0 : index
    %18 = vector.load %arg7[%c9, %c0_29, %c0_30] : memref<10x10x4xf32, #tpu.memory_space<vmem>>, vector<1x10x4xf32>
    tpu.vector_store %arg7[%c9, %c0_29, %c0_30], %15 {strides = array<i32>} : memref<10x10x4xf32, #tpu.memory_space<vmem>>, vector<1x10x4xf32>,
    %c0_31 = arith.constant 0 : index
    %c0_32 = arith.constant 0 : index
    %c0_33 = arith.constant 0 : index
    %19 = vector.load %arg7[%c0_31, %c0_32, %c0_33] : memref<10x10x4xf32, #tpu.memory_space<vmem>>, vector<10x1x4xf32>
    tpu.vector_store %arg7[%c0_31, %c0_32, %c0_33], %16 {strides = array<i32>} : memref<10x10x4xf32, #tpu.memory_space<vmem>>, vector<10x1x4xf32>,
    %c0_34 = arith.constant 0 : index
    %c9_35 = arith.constant 9 : index
    %c0_36 = arith.constant 0 : index
    %20 = vector.load %arg7[%c0_34, %c9_35, %c0_36] : memref<10x10x4xf32, #tpu.memory_space<vmem>>, vector<10x1x4xf32>
    tpu.vector_store %arg7[%c0_34, %c9_35, %c0_36], %16 {strides = array<i32>} : memref<10x10x4xf32, #tpu.memory_space<vmem>>, vector<10x1x4xf32>,
    %c1_37 = arith.constant 1 : index
    %c1_38 = arith.constant 1 : index
    %c0_39 = arith.constant 0 : index
    %21 = vector.load %arg7[%c1_37, %c1_38, %c0_39] : memref<10x10x4xf32, #tpu.memory_space<vmem>>, vector<8x8x4xf32>
    tpu.vector_store %arg7[%c1_37, %c1_38, %c0_39], %14 {strides = array<i32>} : memref<10x10x4xf32, #tpu.memory_space<vmem>>, vector<8x8x4xf32>,
    %c0_40 = arith.constant 0 : index
    %c0_41 = arith.constant 0 : index
    %c0_42 = arith.constant 0 : index
    %22 = vector.load %arg7[%c0_40, %c0_41, %c0_42] : memref<10x10x4xf32, #tpu.memory_space<vmem>>, vector<8x8x4xf32>
    %23 = vector.shape_cast %22 : vector<8x8x4xf32> to vector<64x4xf32>
    %c0_43 = arith.constant 0 : index
    %c1_44 = arith.constant 1 : index
    %c0_45 = arith.constant 0 : index
    %24 = vector.load %arg7[%c0_43, %c1_44, %c0_45] : memref<10x10x4xf32, #tpu.memory_space<vmem>>, vector<8x8x4xf32>
    %25 = vector.shape_cast %24 : vector<8x8x4xf32> to vector<64x4xf32>
    %c0_46 = arith.constant 0 : index
    %c2 = arith.constant 2 : index
    %c0_47 = arith.constant 0 : index
    %26 = vector.load %arg7[%c0_46, %c2, %c0_47] : memref<10x10x4xf32, #tpu.memory_space<vmem>>, vector<8x8x4xf32>
    %27 = vector.shape_cast %26 : vector<8x8x4xf32> to vector<64x4xf32>
    %c1_48 = arith.constant 1 : index
    %c0_49 = arith.constant 0 : index
    %c0_50 = arith.constant 0 : index
    %28 = vector.load %arg7[%c1_48, %c0_49, %c0_50] : memref<10x10x4xf32, #tpu.memory_space<vmem>>, vector<8x8x4xf32>
    %29 = vector.shape_cast %28 : vector<8x8x4xf32> to vector<64x4xf32>
    %c1_51 = arith.constant 1 : index
    %c1_52 = arith.constant 1 : index
    %c0_53 = arith.constant 0 : index
    %30 = vector.load %arg7[%c1_51, %c1_52, %c0_53] : memref<10x10x4xf32, #tpu.memory_space<vmem>>, vector<8x8x4xf32>
    %31 = vector.shape_cast %30 : vector<8x8x4xf32> to vector<64x4xf32>
    %c1_54 = arith.constant 1 : index
    %c2_55 = arith.constant 2 : index
    %c0_56 = arith.constant 0 : index
    %32 = vector.load %arg7[%c1_54, %c2_55, %c0_56] : memref<10x10x4xf32, #tpu.memory_space<vmem>>, vector<8x8x4xf32>
    %33 = vector.shape_cast %32 : vector<8x8x4xf32> to vector<64x4xf32>
    %c2_57 = arith.constant 2 : index
    %c0_58 = arith.constant 0 : index
    %c0_59 = arith.constant 0 : index
    %34 = vector.load %arg7[%c2_57, %c0_58, %c0_59] : memref<10x10x4xf32, #tpu.memory_space<vmem>>, vector<8x8x4xf32>
    %35 = vector.shape_cast %34 : vector<8x8x4xf32> to vector<64x4xf32>
    %c2_60 = arith.constant 2 : index
    %c1_61 = arith.constant 1 : index
    %c0_62 = arith.constant 0 : index
    %36 = vector.load %arg7[%c2_60, %c1_61, %c0_62] : memref<10x10x4xf32, #tpu.memory_space<vmem>>, vector<8x8x4xf32>
    %37 = vector.shape_cast %36 : vector<8x8x4xf32> to vector<64x4xf32>
    %c2_63 = arith.constant 2 : index
    %c2_64 = arith.constant 2 : index
    %c0_65 = arith.constant 0 : index
    %38 = vector.load %arg7[%c2_63, %c2_64, %c0_65] : memref<10x10x4xf32, #tpu.memory_space<vmem>>, vector<8x8x4xf32>
    %39 = vector.shape_cast %38 : vector<8x8x4xf32> to vector<64x4xf32>
    %40 = tpu.concatenate %23, %25, %27, %29, %31, %33, %35, %37, %39 in 1 : vector<64x4xf32>, vector<64x4xf32>, vector<64x4xf32>, vector<64x4xf32>, vector<64x4xf32>, vector<64x4xf32>, vector<64x4xf32>, vector<64x4xf32>, vector<64x4xf32> -> vector<64x36xf32>
    %c0_66 = arith.constant 0 : index
    %c0_67 = arith.constant 0 : index
    %41 = vector.load %arg2[%c0_66, %c0_67] : memref<36x8xf32, #tpu.memory_space<vmem>>, vector<36x8xf32>
    %cst_68 = arith.constant dense<0.000000e+00> : vector<64x8xf32>
    %42 = tpu.matmul %40, %41, %cst_68 {dimension_numbers = #tpu.dot_dimension_numbers<[1], [0], [0], [1], [0, 0, 1, 1], [], []>} : vector<64x36xf32>, vector<36x8xf32>, vector<64x8xf32> -> vector<64x8xf32>
    %c0_69 = arith.constant 0 : index
    %c0_70 = arith.constant 0 : index
    %43 = vector.load %arg3[%c0_69, %c0_70] : memref<1x8xf32, #tpu.memory_space<vmem>>, vector<1x8xf32>
    %44 = vector.broadcast %43 : vector<1x8xf32> to vector<64x8xf32>
    %45 = arith.addf %42, %44 : vector<64x8xf32>
    %cst_71 = arith.constant 0.000000e+00 : f32
    %46 = vector.broadcast %cst_71 : f32 to vector<64x8xf32>
    %47 = arith.maximumf %45, %46 : vector<64x8xf32>
    %48 = vector.shape_cast %47 : vector<64x8xf32> to vector<8x8x8xf32>
    %cst_72 = arith.constant 0.000000e+00 : f32
    %49 = vector.broadcast %cst_72 : f32 to vector<1x10x8xf32>
    %cst_73 = arith.constant 0.000000e+00 : f32
    %50 = vector.broadcast %cst_73 : f32 to vector<10x1x8xf32>
    %c0_74 = arith.constant 0 : index
    %c0_75 = arith.constant 0 : index
    %c0_76 = arith.constant 0 : index
    %51 = vector.load %arg8[%c0_74, %c0_75, %c0_76] : memref<10x10x8xf32, #tpu.memory_space<vmem>>, vector<1x10x8xf32>
    tpu.vector_store %arg8[%c0_74, %c0_75, %c0_76], %49 {strides = array<i32>} : memref<10x10x8xf32, #tpu.memory_space<vmem>>, vector<1x10x8xf32>,
    %c9_77 = arith.constant 9 : index
    %c0_78 = arith.constant 0 : index
    %c0_79 = arith.constant 0 : index
    %52 = vector.load %arg8[%c9_77, %c0_78, %c0_79] : memref<10x10x8xf32, #tpu.memory_space<vmem>>, vector<1x10x8xf32>
    tpu.vector_store %arg8[%c9_77, %c0_78, %c0_79], %49 {strides = array<i32>} : memref<10x10x8xf32, #tpu.memory_space<vmem>>, vector<1x10x8xf32>,
    %c0_80 = arith.constant 0 : index
    %c0_81 = arith.constant 0 : index
    %c0_82 = arith.constant 0 : index
    %53 = vector.load %arg8[%c0_80, %c0_81, %c0_82] : memref<10x10x8xf32, #tpu.memory_space<vmem>>, vector<10x1x8xf32>
    tpu.vector_store %arg8[%c0_80, %c0_81, %c0_82], %50 {strides = array<i32>} : memref<10x10x8xf32, #tpu.memory_space<vmem>>, vector<10x1x8xf32>,
    %c0_83 = arith.constant 0 : index
    %c9_84 = arith.constant 9 : index
    %c0_85 = arith.constant 0 : index
    %54 = vector.load %arg8[%c0_83, %c9_84, %c0_85] : memref<10x10x8xf32, #tpu.memory_space<vmem>>, vector<10x1x8xf32>
    tpu.vector_store %arg8[%c0_83, %c9_84, %c0_85], %50 {strides = array<i32>} : memref<10x10x8xf32, #tpu.memory_space<vmem>>, vector<10x1x8xf32>,
    %c1_86 = arith.constant 1 : index
    %c1_87 = arith.constant 1 : index
    %c0_88 = arith.constant 0 : index
    %55 = vector.load %arg8[%c1_86, %c1_87, %c0_88] : memref<10x10x8xf32, #tpu.memory_space<vmem>>, vector<8x8x8xf32>
    tpu.vector_store %arg8[%c1_86, %c1_87, %c0_88], %48 {strides = array<i32>} : memref<10x10x8xf32, #tpu.memory_space<vmem>>, vector<8x8x8xf32>,
    %c0_89 = arith.constant 0 : index
    %c0_90 = arith.constant 0 : index
    %c0_91 = arith.constant 0 : index
    %56 = vector.load %arg8[%c0_89, %c0_90, %c0_91] : memref<10x10x8xf32, #tpu.memory_space<vmem>>, vector<8x8x8xf32>
    %57 = vector.shape_cast %56 : vector<8x8x8xf32> to vector<64x8xf32>
    %c0_92 = arith.constant 0 : index
    %c1_93 = arith.constant 1 : index
    %c0_94 = arith.constant 0 : index
    %58 = vector.load %arg8[%c0_92, %c1_93, %c0_94] : memref<10x10x8xf32, #tpu.memory_space<vmem>>, vector<8x8x8xf32>
    %59 = vector.shape_cast %58 : vector<8x8x8xf32> to vector<64x8xf32>
    %c0_95 = arith.constant 0 : index
    %c2_96 = arith.constant 2 : index
    %c0_97 = arith.constant 0 : index
    %60 = vector.load %arg8[%c0_95, %c2_96, %c0_97] : memref<10x10x8xf32, #tpu.memory_space<vmem>>, vector<8x8x8xf32>
    %61 = vector.shape_cast %60 : vector<8x8x8xf32> to vector<64x8xf32>
    %c1_98 = arith.constant 1 : index
    %c0_99 = arith.constant 0 : index
    %c0_100 = arith.constant 0 : index
    %62 = vector.load %arg8[%c1_98, %c0_99, %c0_100] : memref<10x10x8xf32, #tpu.memory_space<vmem>>, vector<8x8x8xf32>
    %63 = vector.shape_cast %62 : vector<8x8x8xf32> to vector<64x8xf32>
    %c1_101 = arith.constant 1 : index
    %c1_102 = arith.constant 1 : index
    %c0_103 = arith.constant 0 : index
    %64 = vector.load %arg8[%c1_101, %c1_102, %c0_103] : memref<10x10x8xf32, #tpu.memory_space<vmem>>, vector<8x8x8xf32>
    %65 = vector.shape_cast %64 : vector<8x8x8xf32> to vector<64x8xf32>
    %c1_104 = arith.constant 1 : index
    %c2_105 = arith.constant 2 : index
    %c0_106 = arith.constant 0 : index
    %66 = vector.load %arg8[%c1_104, %c2_105, %c0_106] : memref<10x10x8xf32, #tpu.memory_space<vmem>>, vector<8x8x8xf32>
    %67 = vector.shape_cast %66 : vector<8x8x8xf32> to vector<64x8xf32>
    %c2_107 = arith.constant 2 : index
    %c0_108 = arith.constant 0 : index
    %c0_109 = arith.constant 0 : index
    %68 = vector.load %arg8[%c2_107, %c0_108, %c0_109] : memref<10x10x8xf32, #tpu.memory_space<vmem>>, vector<8x8x8xf32>
    %69 = vector.shape_cast %68 : vector<8x8x8xf32> to vector<64x8xf32>
    %c2_110 = arith.constant 2 : index
    %c1_111 = arith.constant 1 : index
    %c0_112 = arith.constant 0 : index
    %70 = vector.load %arg8[%c2_110, %c1_111, %c0_112] : memref<10x10x8xf32, #tpu.memory_space<vmem>>, vector<8x8x8xf32>
    %71 = vector.shape_cast %70 : vector<8x8x8xf32> to vector<64x8xf32>
    %c2_113 = arith.constant 2 : index
    %c2_114 = arith.constant 2 : index
    %c0_115 = arith.constant 0 : index
    %72 = vector.load %arg8[%c2_113, %c2_114, %c0_115] : memref<10x10x8xf32, #tpu.memory_space<vmem>>, vector<8x8x8xf32>
    %73 = vector.shape_cast %72 : vector<8x8x8xf32> to vector<64x8xf32>
    %74 = tpu.concatenate %57, %59, %61, %63, %65, %67, %69, %71, %73 in 1 : vector<64x8xf32>, vector<64x8xf32>, vector<64x8xf32>, vector<64x8xf32>, vector<64x8xf32>, vector<64x8xf32>, vector<64x8xf32>, vector<64x8xf32>, vector<64x8xf32> -> vector<64x72xf32>
    %c0_116 = arith.constant 0 : index
    %c0_117 = arith.constant 0 : index
    %75 = vector.load %arg4[%c0_116, %c0_117] : memref<72x8xf32, #tpu.memory_space<vmem>>, vector<72x8xf32>
    %cst_118 = arith.constant dense<0.000000e+00> : vector<64x8xf32>
    %76 = tpu.matmul %74, %75, %cst_118 {dimension_numbers = #tpu.dot_dimension_numbers<[1], [0], [0], [1], [0, 0, 1, 1], [], []>} : vector<64x72xf32>, vector<72x8xf32>, vector<64x8xf32> -> vector<64x8xf32>
    %c0_119 = arith.constant 0 : index
    %c0_120 = arith.constant 0 : index
    %77 = vector.load %arg5[%c0_119, %c0_120] : memref<1x8xf32, #tpu.memory_space<vmem>>, vector<1x8xf32>
    %78 = vector.broadcast %77 : vector<1x8xf32> to vector<64x8xf32>
    %79 = arith.addf %76, %78 : vector<64x8xf32>
    %cst_121 = arith.constant 0.000000e+00 : f32
    %80 = vector.broadcast %cst_121 : f32 to vector<64x8xf32>
    %81 = arith.maximumf %79, %80 : vector<64x8xf32>
    %82 = vector.shape_cast %81 : vector<64x8xf32> to vector<8x8x8xf32>
    %c0_122 = arith.constant 0 : index
    %c0_123 = arith.constant 0 : index
    %c0_124 = arith.constant 0 : index
    %c0_125 = arith.constant 0 : index
    %83 = vector.load %arg6[%c0_122, %c0_123, %c0_124, %c0_125] : memref<1x8x8x8xf32, #tpu.memory_space<vmem>>, vector<1x8x8x8xf32>
    %84 = vector.shape_cast %83 : vector<1x8x8x8xf32> to vector<8x8x8xf32>
    %85 = vector.shape_cast %82 : vector<8x8x8xf32> to vector<1x8x8x8xf32>
    tpu.vector_store %arg6[%c0_122, %c0_123, %c0_124, %c0_125], %85 {strides = array<i32>} : memref<1x8x8x8xf32, #tpu.memory_space<vmem>>, vector<1x8x8x8xf32>,
    return
  }
  func.func @transform_0(%arg0: i32) -> (i32, i32, i32, i32) {
    %c0_i32 = arith.constant 0 : i32
    %c0_i32_0 = arith.constant 0 : i32
    %c0_i32_1 = arith.constant 0 : i32
    %c0_i32_2 = arith.constant 0 : i32
    return %arg0, %c0_i32, %c0_i32_0, %c0_i32_1 : i32, i32, i32, i32
  }
  func.func @transform_1(%arg0: i32) -> (i32, i32) {
    %c0_i32 = arith.constant 0 : i32
    %c0_i32_0 = arith.constant 0 : i32
    %c0_i32_1 = arith.constant 0 : i32
    return %c0_i32, %c0_i32_0 : i32, i32
  }
  func.func @transform_2(%arg0: i32) -> (i32, i32) {
    %c0_i32 = arith.constant 0 : i32
    %c0_i32_0 = arith.constant 0 : i32
    %c0_i32_1 = arith.constant 0 : i32
    return %c0_i32, %c0_i32_0 : i32, i32
  }
  func.func @transform_3(%arg0: i32) -> (i32, i32) {
    %c0_i32 = arith.constant 0 : i32
    %c0_i32_0 = arith.constant 0 : i32
    %c0_i32_1 = arith.constant 0 : i32
    return %c0_i32, %c0_i32_0 : i32, i32
  }
  func.func @transform_4(%arg0: i32) -> (i32, i32) {
    %c0_i32 = arith.constant 0 : i32
    %c0_i32_0 = arith.constant 0 : i32
    %c0_i32_1 = arith.constant 0 : i32
    return %c0_i32, %c0_i32_0 : i32, i32
  }
  func.func @transform_5(%arg0: i32) -> (i32, i32, i32, i32) {
    %c0_i32 = arith.constant 0 : i32
    %c0_i32_0 = arith.constant 0 : i32
    %c0_i32_1 = arith.constant 0 : i32
    %c0_i32_2 = arith.constant 0 : i32
    return %arg0, %c0_i32, %c0_i32_0, %c0_i32_1 : i32, i32, i32, i32
  }
}

</mosaic_0001>

<llo_original>
// kernel: down_forward.1
$region0: #{down_forward.1}
  #allocation0 [shape = 'u32[]', space=smem, size = 0x4, offset = 0x4, fixed_abs, tag = 'smem constant byte address 0x4 - core index']
  #allocation1 [shape = 'u32[144,128]{1,0:T(1,128)}', space=vmem, size = 0x12000, scoped, tag = 'internal scratch']
  #allocation2 [shape = 'f32[10,10,4]{2,1,0:T(8,128)}', space=vmem, size = 0x14000, scoped, tag = 'scratch operand']
  #allocation3 [shape = 'f32[10,10,8]{2,1,0:T(8,128)}', space=vmem, size = 0x14000, scoped, tag = 'scratch operand']
  %s0 = inlined_call_operand.vmem [shape: f32[2,16,16,4], index: 0, kind: input, shape index: {}]
  %s1 = inlined_call_operand.vmem [shape: f32[36,8], index: 1, kind: input, shape index: {}]
  %s2 = inlined_call_operand.vmem [shape: f32[1,8], index: 2, kind: input, shape index: {}]
  %s3 = inlined_call_operand.vmem [shape: f32[72,8], index: 3, kind: input, shape index: {}]
  %s4 = inlined_call_operand.vmem [shape: f32[1,8], index: 4, kind: input, shape index: {}]
  %s5 = inlined_call_operand.vmem [shape: f32[2,8,8,8], index: 5, kind: output, shape index: {}]
  %s6 = sld [smem:[#allocation0]]
  $region53: #{down_forward.1} parent=0
    _
  %s8 = ssub.s32 1, %s6
  %s9 = scalar_select 0, %s8, %s6
  loop: start=0, step=1, limit=4
  $region2: #{down_forward.1} parent=0 // loop_pre_header
    _
  $region3: #{down_forward.1} parent=0 // loop_header
    %s11 = sphi 0, %s15
    %p12 = scmp.ge.s32.totalorder %s11, 4
    %s21 = sphi 0, %s23
    %s24 = sphi 0, %s21
    %s25 = sphi 0, %s24
    %s41 = sphi 0, %s25
    %s45 = sphi 0, %s45
    %s47 = sphi 0, %s45
    %s48 = sphi 0, %s47
    %s62 = sphi 0, %s48
    %s66 = sphi 0, %s66
    %s68 = sphi 0, %s66
    %s69 = sphi 0, %s68
    %s83 = sphi 0, %s69
    %s87 = sphi 0, %s87
    %s89 = sphi 0, %s87
    %s90 = sphi 0, %s89
    %s104 = sphi 0, %s90
    %s108 = sphi 0, %s108
    %s110 = sphi 0, %s108
    %s111 = sphi 0, %s110
    %s125 = sphi 0, %s111
    %s131 = sphi 0, %s133
    %s134 = sphi 0, %s131
    %s135 = sphi 0, %s134
    %s151 = sphi 0, %s135
  $region4: #{down_forward.1} parent=0 // loop_header_branch
    %14 = sbr.rel (%p12) target = $region8
  $region5: #{down_forward.1} parent=0 // loop_body
    %s16 = ssub.s32 %s11, 1
    %s17 = ssub.s32 %s11, 2
    %s18 = sadd.s32 %s11, 1
    %s19 = ssub.s32 %s11, %s18
    %p20 = scmp.eq.s32.totalorder %s19, 0
    %s22 = sadd.s32 %s21, 1
    %s23 = scalar_select %p20, %s21, %s22
    %p26 = pneg %p20
    %p27 = scmp.eq.s32.totalorder %s11, 1
    %p28 = por %p26, %p27
    %p29 = scmp.ne.s32.totalorder %s21, %s24
    %p30 = scmp.eq.s32.totalorder %s11, 0
    %p31 = por %p29, %p30
    %p32 = scmp.ne.s32.totalorder %s21, %s24
    %p33 = scmp.eq.s32.totalorder %s16, 1
    %p34 = por %p32, %p33
    %p35 = scmp.ne.s32.totalorder %s24, %s25
    %p36 = scmp.eq.s32.totalorder %s16, 0
    %p37 = por %p35, %p36
    %p38 = scmp.ne.s32.totalorder %s24, %s25
    %p39 = scmp.eq.s32.totalorder %s17, 1
    %p40 = por %p38, %p39
    %p42 = scmp.ne.s32.totalorder %s25, %s41
    %p43 = scmp.eq.s32.totalorder %s17, 0
    %p44 = por %p42, %p43
    %s46 = sadd.s32 %s45, 1
    %p49 = scmp.eq.s32.totalorder %s11, 1
    %p50 = scmp.ne.s32.totalorder %s45, %s47
    %p51 = scmp.eq.s32.totalorder %s11, 0
    %p52 = por %p50, %p51
    %p53 = scmp.ne.s32.totalorder %s45, %s47
    %p54 = scmp.eq.s32.totalorder %s16, 1
    %p55 = por %p53, %p54
    %p56 = scmp.ne.s32.totalorder %s47, %s48
    %p57 = scmp.eq.s32.totalorder %s16, 0
    %p58 = por %p56, %p57
    %p59 = scmp.ne.s32.totalorder %s47, %s48
    %p60 = scmp.eq.s32.totalorder %s17, 1
    %p61 = por %p59, %p60
    %p63 = scmp.ne.s32.totalorder %s48, %s62
    %p64 = scmp.eq.s32.totalorder %s17, 0
    %p65 = por %p63, %p64
    %s67 = sadd.s32 %s66, 1
    %p70 = scmp.eq.s32.totalorder %s11, 1
    %p71 = scmp.ne.s32.totalorder %s66, %s68
    %p72 = scmp.eq.s32.totalorder %s11, 0
    %p73 = por %p71, %p72
    %p74 = scmp.ne.s32.totalorder %s66, %s68
    %p75 = scmp.eq.s32.totalorder %s16, 1
    %p76 = por %p74, %p75
    %p77 = scmp.ne.s32.totalorder %s68, %s69
    %p78 = scmp.eq.s32.totalorder %s16, 0
    %p79 = por %p77, %p78
    %p80 = scmp.ne.s32.totalorder %s68, %s69
    %p81 = scmp.eq.s32.totalorder %s17, 1
    %p82 = por %p80, %p81
    %p84 = scmp.ne.s32.totalorder %s69, %s83
    %p85 = scmp.eq.s32.totalorder %s17, 0
    %p86 = por %p84, %p85
    %s88 = sadd.s32 %s87, 1
    %p91 = scmp.eq.s32.totalorder %s11, 1
    %p92 = scmp.ne.s32.totalorder %s87, %s89
    %p93 = scmp.eq.s32.totalorder %s11, 0
    %p94 = por %p92, %p93
    %p95 = scmp.ne.s32.totalorder %s87, %s89
    %p96 = scmp.eq.s32.totalorder %s16, 1
    %p97 = por %p95, %p96
    %p98 = scmp.ne.s32.totalorder %s89, %s90
    %p99 = scmp.eq.s32.totalorder %s16, 0
    %p100 = por %p98, %p99
    %p101 = scmp.ne.s32.totalorder %s89, %s90
    %p102 = scmp.eq.s32.totalorder %s17, 1
    %p103 = por %p101, %p102
    %p105 = scmp.ne.s32.totalorder %s90, %s104
    %p106 = scmp.eq.s32.totalorder %s17, 0
    %p107 = por %p105, %p106
    %s109 = sadd.s32 %s108, 1
    %p112 = scmp.eq.s32.totalorder %s11, 1
    %p113 = scmp.ne.s32.totalorder %s108, %s110
    %p114 = scmp.eq.s32.totalorder %s11, 0
    %p115 = por %p113, %p114
    %p116 = scmp.ne.s32.totalorder %s108, %s110
    %p117 = scmp.eq.s32.totalorder %s16, 1
    %p118 = por %p116, %p117
    %p119 = scmp.ne.s32.totalorder %s110, %s111
    %p120 = scmp.eq.s32.totalorder %s16, 0
    %p121 = por %p119, %p120
    %p122 = scmp.ne.s32.totalorder %s110, %s111
    %p123 = scmp.eq.s32.totalorder %s17, 1
    %p124 = por %p122, %p123
    %p126 = scmp.ne.s32.totalorder %s111, %s125
    %p127 = scmp.eq.s32.totalorder %s17, 0
    %p128 = por %p126, %p127
    %s129 = ssub.s32 %s11, %s18
    %p130 = scmp.eq.s32.totalorder %s129, 0
    %s132 = sadd.s32 %s131, 1
    %s133 = scalar_select %p130, %s131, %s132
    %p136 = pneg %p130
    %p137 = scmp.eq.s32.totalorder %s11, 1
    %p138 = por %p136, %p137
    %p139 = scmp.ne.s32.totalorder %s131, %s134
    %p140 = scmp.eq.s32.totalorder %s11, 0
    %p141 = por %p139, %p140
    %p142 = scmp.ne.s32.totalorder %s131, %s134
    %p143 = scmp.eq.s32.totalorder %s16, 1
    %p144 = por %p142, %p143
    %p145 = scmp.ne.s32.totalorder %s134, %s135
    %p146 = scmp.eq.s32.totalorder %s16, 0
    %p147 = por %p145, %p146
    %p148 = scmp.ne.s32.totalorder %s134, %s135
    %p149 = scmp.eq.s32.totalorder %s17, 1
    %p150 = por %p148, %p149
    %p152 = scmp.ne.s32.totalorder %s135, %s151
    %p153 = scmp.eq.s32.totalorder %s17, 0
    %p154 = por %p152, %p153
    %p155 = scmp.le.s32.totalorder 1, %s11
    %p156 = scmp.lt.s32.totalorder %s11, 3
    %p157 = pnand %p155, %p156
    %p158 = pneg %p157
    // Predicated region
    $region9: #{down_forward.1} parent=5 // pred_check
      _
    $region10: #{down_forward.1} parent=5 // pred_check_branch
      %160 = sbr.rel (%p157) target = $region12
    $region11: #{down_forward.1} parent=5 // pred_region
      %s161 = ssub.s32 %s11, 1
      // Predicated region
      $region13: #{down_forward.1} parent=11 // pred_check
        %p162 = pneg %p58
      $region14: #{down_forward.1} parent=11 // pred_check_branch
        %164 = sbr.rel (%p162) target = $region16
      $region15: #{down_forward.1} parent=11 // pred_region
        _
      $region16: #{down_forward.1} parent=11 // pred_fallthru
        _
      // Predicated region
      $region17: #{down_forward.1} parent=11 // pred_check
        %p165 = pneg %p79
      $region18: #{down_forward.1} parent=11 // pred_check_branch
        %167 = sbr.rel (%p165) target = $region20
      $region19: #{down_forward.1} parent=11 // pred_region
        _
      $region20: #{down_forward.1} parent=11 // pred_fallthru
        _
      // Predicated region
      $region21: #{down_forward.1} parent=11 // pred_check
        %p168 = pneg %p100
      $region22: #{down_forward.1} parent=11 // pred_check_branch
        %170 = sbr.rel (%p168) target = $region24
      $region23: #{down_forward.1} parent=11 // pred_region
        _
      $region24: #{down_forward.1} parent=11 // pred_fallthru
        _
      // Predicated region
      $region25: #{down_forward.1} parent=11 // pred_check
        %p171 = pneg %p121
      $region26: #{down_forward.1} parent=11 // pred_check_branch
        %173 = sbr.rel (%p171) target = $region28
      $region27: #{down_forward.1} parent=11 // pred_region
        _
      $region28: #{down_forward.1} parent=11 // pred_fallthru
        _
    $region12: #{down_forward.1} parent=5 // pred_fallthru
      _
    %p174 = scmp.lt.s32.totalorder %s11, 2
    // Predicated region
    $region29: #{down_forward.1} parent=5 // pred_check
      %p175 = pneg %p174
    $region30: #{down_forward.1} parent=5 // pred_check_branch
      %177 = sbr.rel (%p175) target = $region32
    $region31: #{down_forward.1} parent=5 // pred_region
      // Predicated region
      $region33: #{down_forward.1} parent=31 // pred_check
        %p178 = pneg %p31
      $region34: #{down_forward.1} parent=31 // pred_check_branch
        %180 = sbr.rel (%p178) target = $region36
      $region35: #{down_forward.1} parent=31 // pred_region
        %p181 = scmp.lt.s32.totalorder %s11, 1
        %s182 = scalar_select %p181, %s11, 1
        %s183 = smul.addr %s182, 32
        %s184 = smul.addr %s183, 8
        %s185 = scalar_lea.vmem %s0, %s184
      $region36: #{down_forward.1} parent=31 // pred_fallthru
        _
    $region32: #{down_forward.1} parent=5 // pred_fallthru
      _
    %p186 = scmp.le.s32.totalorder 1, %s11
    %p187 = scmp.lt.s32.totalorder %s11, 3
    %p188 = pnand %p186, %p187
    %p189 = pneg %p188
    // Predicated region
    $region37: #{down_forward.1} parent=5 // pred_check
      _
    $region38: #{down_forward.1} parent=5 // pred_check_branch
      %191 = sbr.rel (%p188) target = $region40
    $region39: #{down_forward.1} parent=5 // pred_region
      %s192 = ssub.s32 %s11, 1
      %p193 = scmp.lt.s32.totalorder %s16, 1
      %s194 = scalar_select %p193, %s16, 1
      %s195 = smul.addr %s194, 32
      %s196 = smul.addr %s195, 8
      %s197 = scalar_lea.vmem %s0, %s196
      %p198 = pneg %p37
      %p199 = pneg %p34
      %p200 = pneg %p58
      %p201 = pneg %p55
      %p202 = pneg %p79
      %p203 = pneg %p76
      %p204 = pneg %p100
      %p205 = pneg %p97
      %p206 = pneg %p121
      %p207 = pneg %p118
      %p208 = pneg %p147
      %p209 = pneg %p144
      %p210 = scmp.lt.s32.totalorder %s16, 1
      %s211 = scalar_select %p210, %s16, 1
      %s212 = smul.addr %s211, 8
      %s213 = smul.addr %s212, 8
      %s214 = scalar_lea.vmem %s5, %s213
      %p215 = scmp.lt.s32.totalorder %s16, 1
      %s216 = scalar_select %p215, %s16, 1
      %s217 = smul.addr %s216, 32
      %s218 = smul.addr %s217, 8
      %s219 = scalar_lea.vmem %s0, %s218
      %p220 = scmp.lt.s32.totalorder %s16, 1
      %s221 = scalar_select %p220, %s16, 1
      %s222 = smul.addr %s221, 8
      %s223 = smul.addr %s222, 8
      %s224 = scalar_lea.vmem %s5, %s223
      %v225 = vld [vmem:[%s219] ss:$2 sm:$0xff]
      %s226 = scalar_lea.vmem %s219, 32
      %v227 = vld [vmem:[%s226] ss:$2 sm:$0xff]
      %s228 = scalar_lea.vmem %s219, 64
      %v229 = vld [vmem:[%s228] ss:$2 sm:$0xff]
      %s230 = scalar_lea.vmem %s219, 96
      %v231 = vld [vmem:[%s230] ss:$2 sm:$0xff]
      %s232 = scalar_lea.vmem %s219, 128
      %v233 = vld [vmem:[%s232] ss:$2 sm:$0xff]
      %s234 = scalar_lea.vmem %s219, 160
      %v235 = vld [vmem:[%s234] ss:$2 sm:$0xff]
      %s236 = scalar_lea.vmem %s219, 192
      %v237 = vld [vmem:[%s236] ss:$2 sm:$0xff]
      %s238 = scalar_lea.vmem %s219, 224
      %v239 = vld [vmem:[%s238] ss:$2 sm:$0xff]
      %s240 = scalar_lea.vmem %s219, 1
      %v241 = vld [vmem:[%s240] ss:$2 sm:$0xff]
      %s242 = scalar_lea.vmem %s219, 33
      %v243 = vld [vmem:[%s242] ss:$2 sm:$0xff]
      %s244 = scalar_lea.vmem %s219, 65
      %v245 = vld [vmem:[%s244] ss:$2 sm:$0xff]
      %s246 = scalar_lea.vmem %s219, 97
      %v247 = vld [vmem:[%s246] ss:$2 sm:$0xff]
      %s248 = scalar_lea.vmem %s219, 129
      %v249 = vld [vmem:[%s248] ss:$2 sm:$0xff]
      %s250 = scalar_lea.vmem %s219, 161
      %v251 = vld [vmem:[%s250] ss:$2 sm:$0xff]
      %s252 = scalar_lea.vmem %s219, 193
      %v253 = vld [vmem:[%s252] ss:$2 sm:$0xff]
      %s254 = scalar_lea.vmem %s219, 225
      %v255 = vld [vmem:[%s254] ss:$2 sm:$0xff]
      %s256 = scalar_lea.vmem %s219, 16
      %v257 = vld [vmem:[%s256] ss:$2 sm:$0xff]
      %s258 = scalar_lea.vmem %s256, 32
      %v259 = vld [vmem:[%s258] ss:$2 sm:$0xff]
      %s260 = scalar_lea.vmem %s256, 64
      %v261 = vld [vmem:[%s260] ss:$2 sm:$0xff]
      %s262 = scalar_lea.vmem %s256, 96
      %v263 = vld [vmem:[%s262] ss:$2 sm:$0xff]
      %s264 = scalar_lea.vmem %s256, 128
      %v265 = vld [vmem:[%s264] ss:$2 sm:$0xff]
      %s266 = scalar_lea.vmem %s256, 160
      %v267 = vld [vmem:[%s266] ss:$2 sm:$0xff]
      %s268 = scalar_lea.vmem %s256, 192
      %v269 = vld [vmem:[%s268] ss:$2 sm:$0xff]
      %s270 = scalar_lea.vmem %s256, 224
      %v271 = vld [vmem:[%s270] ss:$2 sm:$0xff]
      %s272 = scalar_lea.vmem %s256, 1
      %v273 = vld [vmem:[%s272] ss:$2 sm:$0xff]
      %s274 = scalar_lea.vmem %s256, 33
      %v275 = vld [vmem:[%s274] ss:$2 sm:$0xff]
      %s276 = scalar_lea.vmem %s256, 65
      %v277 = vld [vmem:[%s276] ss:$2 sm:$0xff]
      %s278 = scalar_lea.vmem %s256, 97
      %v279 = vld [vmem:[%s278] ss:$2 sm:$0xff]
      %s280 = scalar_lea.vmem %s256, 129
      %v281 = vld [vmem:[%s280] ss:$2 sm:$0xff]
      %s282 = scalar_lea.vmem %s256, 161
      %v283 = vld [vmem:[%s282] ss:$2 sm:$0xff]
      %s284 = scalar_lea.vmem %s256, 193
      %v285 = vld [vmem:[%s284] ss:$2 sm:$0xff]
      %s286 = scalar_lea.vmem %s256, 225
      %v287 = vld [vmem:[%s286] ss:$2 sm:$0xff]
      %v288 = vmax.f32 %v225, %v241
      %v289 = vmax.f32 %v227, %v243
      %v290 = vmax.f32 %v229, %v245
      %v291 = vmax.f32 %v231, %v247
      %v292 = vmax.f32 %v233, %v249
      %v293 = vmax.f32 %v235, %v251
      %v294 = vmax.f32 %v237, %v253
      %v295 = vmax.f32 %v239, %v255
      %v296 = vmax.f32 %v257, %v273
      %v297 = vmax.f32 %v259, %v275
      %v298 = vmax.f32 %v261, %v277
      %v299 = vmax.f32 %v263, %v279
      %v300 = vmax.f32 %v265, %v281
      %v301 = vmax.f32 %v267, %v283
      %v302 = vmax.f32 %v269, %v285
      %v303 = vmax.f32 %v271, %v287
      %v304 = vmax.f32 %v288, %v296
      %v305 = vmax.f32 %v289, %v297
      %v306 = vmax.f32 %v290, %v298
      %v307 = vmax.f32 %v291, %v299
      %v308 = vmax.f32 %v292, %v300
      %v309 = vmax.f32 %v293, %v301
      %v310 = vmax.f32 %v294, %v302
      %v311 = vmax.f32 %v295, %v303
      %vm312 = vcmask 31744
      %313 = vst.msk [vmem:[#allocation2] sm:$0xff] %vm312, 0.0
      %vm314 = vcmask 25600
      %315 = vst.msk [vmem:[#allocation2 + $0x8] sm:$0x3] %vm314, 0.0
      %s316 = scalar_lea.vmem [#allocation2], 144
      %317 = vst.msk [vmem:[%s316] sm:$0xff] %vm312, 0.0
      %318 = vst.msk [vmem:[%s316 + $0x8] sm:$0x3] %vm314, 0.0
      %vm319 = vcmask 24576
      %320 = vst.msk [vmem:[#allocation2] sm:$0x1] %vm319, 0.0
      %321 = vst.msk [vmem:[#allocation2 + $0x10] sm:$0x1] %vm319, 0.0
      %322 = vst.msk [vmem:[#allocation2 + $0x20] sm:$0x1] %vm319, 0.0
      %323 = vst.msk [vmem:[#allocation2 + $0x30] sm:$0x1] %vm319, 0.0
      %324 = vst.msk [vmem:[#allocation2 + $0x40] sm:$0x1] %vm319, 0.0
      %325 = vst.msk [vmem:[#allocation2 + $0x50] sm:$0x1] %vm319, 0.0
      %326 = vst.msk [vmem:[#allocation2 + $0x60] sm:$0x1] %vm319, 0.0
      %327 = vst.msk [vmem:[#allocation2 + $0x70] sm:$0x1] %vm319, 0.0
      %328 = vst.msk [vmem:[#allocation2 + $0x80] sm:$0x1] %vm319, 0.0
      %329 = vst.msk [vmem:[#allocation2 + $0x90] sm:$0x1] %vm319, 0.0
      %330 = vst.msk [vmem:[#allocation2 + $0x9] sm:$0x1] %vm319, 0.0
      %331 = vst.msk [vmem:[#allocation2 + $0x19] sm:$0x1] %vm319, 0.0
      %332 = vst.msk [vmem:[#allocation2 + $0x29] sm:$0x1] %vm319, 0.0
      %333 = vst.msk [vmem:[#allocation2 + $0x39] sm:$0x1] %vm319, 0.0
      %334 = vst.msk [vmem:[#allocation2 + $0x49] sm:$0x1] %vm319, 0.0
      %335 = vst.msk [vmem:[#allocation2 + $0x59] sm:$0x1] %vm319, 0.0
      %336 = vst.msk [vmem:[#allocation2 + $0x69] sm:$0x1] %vm319, 0.0
      %337 = vst.msk [vmem:[#allocation2 + $0x79] sm:$0x1] %vm319, 0.0
      %338 = vst.msk [vmem:[#allocation2 + $0x89] sm:$0x1] %vm319, 0.0
      %339 = vst.msk [vmem:[#allocation2 + $0x99] sm:$0x1] %vm319, 0.0
      %s340 = scalar_lea.vmem [#allocation2], 16
      %341 = vst.msk [vmem:[%s340 + $0x1] sm:$0xff] %vm312, %v304
      %342 = vst.msk [vmem:[%s340 + $0x11] sm:$0xff] %vm312, %v305
      %343 = vst.msk [vmem:[%s340 + $0x21] sm:$0xff] %vm312, %v306
      %344 = vst.msk [vmem:[%s340 + $0x31] sm:$0xff] %vm312, %v307
      %345 = vst.msk [vmem:[%s340 + $0x41] sm:$0xff] %vm312, %v308
      %346 = vst.msk [vmem:[%s340 + $0x51] sm:$0xff] %vm312, %v309
      %347 = vst.msk [vmem:[%s340 + $0x61] sm:$0xff] %vm312, %v310
      %348 = vst.msk [vmem:[%s340 + $0x71] sm:$0xff] %vm312, %v311
      %v349 = vld [vmem:[#allocation2] sm:$0xff]
      %v350 = vld [vmem:[#allocation2 + $0x10] sm:$0xff]
      %v351 = vld [vmem:[#allocation2 + $0x20] sm:$0xff]
      %v352 = vld [vmem:[#allocation2 + $0x30] sm:$0xff]
      %v353 = vld [vmem:[#allocation2 + $0x40] sm:$0xff]
      %v354 = vld [vmem:[#allocation2 + $0x50] sm:$0xff]
      %v355 = vld [vmem:[#allocation2 + $0x60] sm:$0xff]
      %v356 = vld [vmem:[#allocation2 + $0x70] sm:$0xff]
      %v357 = vld [vmem:[#allocation2 + $0x1] sm:$0xff]
      %v358 = vld [vmem:[#allocation2 + $0x11] sm:$0xff]
      %v359 = vld [vmem:[#allocation2 + $0x21] sm:$0xff]
      %v360 = vld [vmem:[#allocation2 + $0x31] sm:$0xff]
      %v361 = vld [vmem:[#allocation2 + $0x41] sm:$0xff]
      %v362 = vld [vmem:[#allocation2 + $0x51] sm:$0xff]
      %v363 = vld [vmem:[#allocation2 + $0x61] sm:$0xff]
      %v364 = vld [vmem:[#allocation2 + $0x71] sm:$0xff]
      %v365 = vld [vmem:[#allocation2 + $0x2] sm:$0xff]
      %v366 = vld [vmem:[#allocation2 + $0x12] sm:$0xff]
      %v367 = vld [vmem:[#allocation2 + $0x22] sm:$0xff]
      %v368 = vld [vmem:[#allocation2 + $0x32] sm:$0xff]
      %v369 = vld [vmem:[#allocation2 + $0x42] sm:$0xff]
      %v370 = vld [vmem:[#allocation2 + $0x52] sm:$0xff]
      %v371 = vld [vmem:[#allocation2 + $0x62] sm:$0xff]
      %v372 = vld [vmem:[#allocation2 + $0x72] sm:$0xff]
      %v373 = vld [vmem:[%s340] sm:$0xff]
      %v374 = vld [vmem:[%s340 + $0x10] sm:$0xff]
      %v375 = vld [vmem:[%s340 + $0x20] sm:$0xff]
      %v376 = vld [vmem:[%s340 + $0x30] sm:$0xff]
      %v377 = vld [vmem:[%s340 + $0x40] sm:$0xff]
      %v378 = vld [vmem:[%s340 + $0x50] sm:$0xff]
      %v379 = vld [vmem:[%s340 + $0x60] sm:$0xff]
      %v380 = vld [vmem:[%s340 + $0x70] sm:$0xff]
      %v381 = vld [vmem:[%s340 + $0x1] sm:$0xff]
      %v382 = vld [vmem:[%s340 + $0x11] sm:$0xff]
      %v383 = vld [vmem:[%s340 + $0x21] sm:$0xff]
      %v384 = vld [vmem:[%s340 + $0x31] sm:$0xff]
      %v385 = vld [vmem:[%s340 + $0x41] sm:$0xff]
      %v386 = vld [vmem:[%s340 + $0x51] sm:$0xff]
      %v387 = vld [vmem:[%s340 + $0x61] sm:$0xff]
      %v388 = vld [vmem:[%s340 + $0x71] sm:$0xff]
      %v389 = vld [vmem:[%s340 + $0x2] sm:$0xff]
      %v390 = vld [vmem:[%s340 + $0x12] sm:$0xff]
      %v391 = vld [vmem:[%s340 + $0x22] sm:$0xff]
      %v392 = vld [vmem:[%s340 + $0x32] sm:$0xff]
      %v393 = vld [vmem:[%s340 + $0x42] sm:$0xff]
      %v394 = vld [vmem:[%s340 + $0x52] sm:$0xff]
      %v395 = vld [vmem:[%s340 + $0x62] sm:$0xff]
      %v396 = vld [vmem:[%s340 + $0x72] sm:$0xff]
      %s397 = scalar_lea.vmem [#allocation2], 32
      %v398 = vld [vmem:[%s397] sm:$0xff]
      %v399 = vld [vmem:[%s397 + $0x10] sm:$0xff]
      %v400 = vld [vmem:[%s397 + $0x20] sm:$0xff]
      %v401 = vld [vmem:[%s397 + $0x30] sm:$0xff]
      %v402 = vld [vmem:[%s397 + $0x40] sm:$0xff]
      %v403 = vld [vmem:[%s397 + $0x50] sm:$0xff]
      %v404 = vld [vmem:[%s397 + $0x60] sm:$0xff]
      %v405 = vld [vmem:[%s397 + $0x70] sm:$0xff]
      %v406 = vld [vmem:[%s397 + $0x1] sm:$0xff]
      %v407 = vld [vmem:[%s397 + $0x11] sm:$0xff]
      %v408 = vld [vmem:[%s397 + $0x21] sm:$0xff]
      %v409 = vld [vmem:[%s397 + $0x31] sm:$0xff]
      %v410 = vld [vmem:[%s397 + $0x41] sm:$0xff]
      %v411 = vld [vmem:[%s397 + $0x51] sm:$0xff]
      %v412 = vld [vmem:[%s397 + $0x61] sm:$0xff]
      %v413 = vld [vmem:[%s397 + $0x71] sm:$0xff]
      %v414 = vld [vmem:[%s397 + $0x2] sm:$0xff]
      %v415 = vld [vmem:[%s397 + $0x12] sm:$0xff]
      %v416 = vld [vmem:[%s397 + $0x22] sm:$0xff]
      %v417 = vld [vmem:[%s397 + $0x32] sm:$0xff]
      %v418 = vld [vmem:[%s397 + $0x42] sm:$0xff]
      %v419 = vld [vmem:[%s397 + $0x52] sm:$0xff]
      %v420 = vld [vmem:[%s397 + $0x62] sm:$0xff]
      %v421 = vld [vmem:[%s397 + $0x72] sm:$0xff]
      %430 = vrot.lane.b32.xlu0 %v357, 4
      %v431 = vpop.permute.xlu0 %430
      %432 = vrot.lane.b32.xlu0 %v358, 4
      %v433 = vpop.permute.xlu0 %432
      %434 = vrot.lane.b32.xlu0 %v359, 4
      %v435 = vpop.permute.xlu0 %434
      %436 = vrot.lane.b32.xlu0 %v360, 4
      %v437 = vpop.permute.xlu0 %436
      %438 = vrot.lane.b32.xlu0 %v361, 4
      %v439 = vpop.permute.xlu0 %438
      %440 = vrot.lane.b32.xlu0 %v362, 4
      %v441 = vpop.permute.xlu0 %440
      %442 = vrot.lane.b32.xlu0 %v363, 4
      %v443 = vpop.permute.xlu0 %442
      %444 = vrot.lane.b32.xlu0 %v364, 4
      %v445 = vpop.permute.xlu0 %444
      %462 = vrot.lane.b32.xlu0 %v365, 8
      %v463 = vpop.permute.xlu0 %462
      %464 = vrot.lane.b32.xlu0 %v366, 8
      %v465 = vpop.permute.xlu0 %464
      %466 = vrot.lane.b32.xlu0 %v367, 8
      %v467 = vpop.permute.xlu0 %466
      %468 = vrot.lane.b32.xlu0 %v368, 8
      %v469 = vpop.permute.xlu0 %468
      %470 = vrot.lane.b32.xlu0 %v369, 8
      %v471 = vpop.permute.xlu0 %470
      %472 = vrot.lane.b32.xlu0 %v370, 8
      %v473 = vpop.permute.xlu0 %472
      %474 = vrot.lane.b32.xlu0 %v371, 8
      %v475 = vpop.permute.xlu0 %474
      %476 = vrot.lane.b32.xlu0 %v372, 8
      %v477 = vpop.permute.xlu0 %476
      %494 = vrot.lane.b32.xlu0 %v373, 12
      %v495 = vpop.permute.xlu0 %494
      %496 = vrot.lane.b32.xlu0 %v374, 12
      %v497 = vpop.permute.xlu0 %496
      %498 = vrot.lane.b32.xlu0 %v375, 12
      %v499 = vpop.permute.xlu0 %498
      %500 = vrot.lane.b32.xlu0 %v376, 12
      %v501 = vpop.permute.xlu0 %500
      %502 = vrot.lane.b32.xlu0 %v377, 12
      %v503 = vpop.permute.xlu0 %502
      %504 = vrot.lane.b32.xlu0 %v378, 12
      %v505 = vpop.permute.xlu0 %504
      %506 = vrot.lane.b32.xlu0 %v379, 12
      %v507 = vpop.permute.xlu0 %506
      %508 = vrot.lane.b32.xlu0 %v380, 12
      %v509 = vpop.permute.xlu0 %508
      %526 = vrot.lane.b32.xlu0 %v381, 16
      %v527 = vpop.permute.xlu0 %526
      %528 = vrot.lane.b32.xlu0 %v382, 16
      %v529 = vpop.permute.xlu0 %528
      %530 = vrot.lane.b32.xlu0 %v383, 16
      %v531 = vpop.permute.xlu0 %530
      %532 = vrot.lane.b32.xlu0 %v384, 16
      %v533 = vpop.permute.xlu0 %532
      %534 = vrot.lane.b32.xlu0 %v385, 16
      %v535 = vpop.permute.xlu0 %534
      %536 = vrot.lane.b32.xlu0 %v386, 16
      %v537 = vpop.permute.xlu0 %536
      %538 = vrot.lane.b32.xlu0 %v387, 16
      %v539 = vpop.permute.xlu0 %538
      %540 = vrot.lane.b32.xlu0 %v388, 16
      %v541 = vpop.permute.xlu0 %540
      %558 = vrot.lane.b32.xlu0 %v389, 20
      %v559 = vpop.permute.xlu0 %558
      %560 = vrot.lane.b32.xlu0 %v390, 20
      %v561 = vpop.permute.xlu0 %560
      %562 = vrot.lane.b32.xlu0 %v391, 20
      %v563 = vpop.permute.xlu0 %562
      %564 = vrot.lane.b32.xlu0 %v392, 20
      %v565 = vpop.permute.xlu0 %564
      %566 = vrot.lane.b32.xlu0 %v393, 20
      %v567 = vpop.permute.xlu0 %566
      %568 = vrot.lane.b32.xlu0 %v394, 20
      %v569 = vpop.permute.xlu0 %568
      %570 = vrot.lane.b32.xlu0 %v395, 20
      %v571 = vpop.permute.xlu0 %570
      %572 = vrot.lane.b32.xlu0 %v396, 20
      %v573 = vpop.permute.xlu0 %572
      %590 = vrot.lane.b32.xlu0 %v398, 24
      %v591 = vpop.permute.xlu0 %590
      %592 = vrot.lane.b32.xlu0 %v399, 24
      %v593 = vpop.permute.xlu0 %592
      %594 = vrot.lane.b32.xlu0 %v400, 24
      %v595 = vpop.permute.xlu0 %594
      %596 = vrot.lane.b32.xlu0 %v401, 24
      %v597 = vpop.permute.xlu0 %596
      %598 = vrot.lane.b32.xlu0 %v402, 24
      %v599 = vpop.permute.xlu0 %598
      %600 = vrot.lane.b32.xlu0 %v403, 24
      %v601 = vpop.permute.xlu0 %600
      %602 = vrot.lane.b32.xlu0 %v404, 24
      %v603 = vpop.permute.xlu0 %602
      %604 = vrot.lane.b32.xlu0 %v405, 24
      %v605 = vpop.permute.xlu0 %604
      %622 = vrot.lane.b32.xlu0 %v406, 28
      %v623 = vpop.permute.xlu0 %622
      %624 = vrot.lane.b32.xlu0 %v407, 28
      %v625 = vpop.permute.xlu0 %624
      %626 = vrot.lane.b32.xlu0 %v408, 28
      %v627 = vpop.permute.xlu0 %626
      %628 = vrot.lane.b32.xlu0 %v409, 28
      %v629 = vpop.permute.xlu0 %628
      %630 = vrot.lane.b32.xlu0 %v410, 28
      %v631 = vpop.permute.xlu0 %630
      %632 = vrot.lane.b32.xlu0 %v411, 28
      %v633 = vpop.permute.xlu0 %632
      %634 = vrot.lane.b32.xlu0 %v412, 28
      %v635 = vpop.permute.xlu0 %634
      %636 = vrot.lane.b32.xlu0 %v413, 28
      %v637 = vpop.permute.xlu0 %636
      %654 = vrot.lane.b32.xlu0 %v414, 32
      %v655 = vpop.permute.xlu0 %654
      %656 = vrot.lane.b32.xlu0 %v415, 32
      %v657 = vpop.permute.xlu0 %656
      %658 = vrot.lane.b32.xlu0 %v416, 32
      %v659 = vpop.permute.xlu0 %658
      %660 = vrot.lane.b32.xlu0 %v417, 32
      %v661 = vpop.permute.xlu0 %660
      %662 = vrot.lane.b32.xlu0 %v418, 32
      %v663 = vpop.permute.xlu0 %662
      %664 = vrot.lane.b32.xlu0 %v419, 32
      %v665 = vpop.permute.xlu0 %664
      %666 = vrot.lane.b32.xlu0 %v420, 32
      %v667 = vpop.permute.xlu0 %666
      %668 = vrot.lane.b32.xlu0 %v421, 32
      %v669 = vpop.permute.xlu0 %668
      %v678 = vsel %vm312, %v349, %v431
      %v679 = vsel %vm312, %v350, %v433
      %v680 = vsel %vm312, %v351, %v435
      %v681 = vsel %vm312, %v352, %v437
      %v682 = vsel %vm312, %v353, %v439
      %v683 = vsel %vm312, %v354, %v441
      %v684 = vsel %vm312, %v355, %v443
      %v685 = vsel %vm312, %v356, %v445
      %vm686 = vcmask 64512
      %v687 = vsel %vm686, %v678, %v463
      %v688 = vsel %vm686, %v679, %v465
      %v689 = vsel %vm686, %v680, %v467
      %v690 = vsel %vm686, %v681, %v469
      %v691 = vsel %vm686, %v682, %v471
      %v692 = vsel %vm686, %v683, %v473
      %v693 = vsel %vm686, %v684, %v475
      %v694 = vsel %vm686, %v685, %v477
      %vm695 = vcmask 97280
      %v696 = vsel %vm695, %v687, %v495
      %v697 = vsel %vm695, %v688, %v497
      %v698 = vsel %vm695, %v689, %v499
      %v699 = vsel %vm695, %v690, %v501
      %v700 = vsel %vm695, %v691, %v503
      %v701 = vsel %vm695, %v692, %v505
      %v702 = vsel %vm695, %v693, %v507
      %v703 = vsel %vm695, %v694, %v509
      %vm704 = vcmask 130048
      %v705 = vsel %vm704, %v696, %v527
      %v706 = vsel %vm704, %v697, %v529
      %v707 = vsel %vm704, %v698, %v531
      %v708 = vsel %vm704, %v699, %v533
      %v709 = vsel %vm704, %v700, %v535
      %v710 = vsel %vm704, %v701, %v537
      %v711 = vsel %vm704, %v702, %v539
      %v712 = vsel %vm704, %v703, %v541
      %vm713 = vcmask 162816
      %v714 = vsel %vm713, %v705, %v559
      %v715 = vsel %vm713, %v706, %v561
      %v716 = vsel %vm713, %v707, %v563
      %v717 = vsel %vm713, %v708, %v565
      %v718 = vsel %vm713, %v709, %v567
      %v719 = vsel %vm713, %v710, %v569
      %v720 = vsel %vm713, %v711, %v571
      %v721 = vsel %vm713, %v712, %v573
      %vm722 = vcmask 195584
      %v723 = vsel %vm722, %v714, %v591
      %v724 = vsel %vm722, %v715, %v593
      %v725 = vsel %vm722, %v716, %v595
      %v726 = vsel %vm722, %v717, %v597
      %v727 = vsel %vm722, %v718, %v599
      %v728 = vsel %vm722, %v719, %v601
      %v729 = vsel %vm722, %v720, %v603
      %v730 = vsel %vm722, %v721, %v605
      %vm731 = vcmask 228352
      %v732 = vsel %vm731, %v723, %v623
      %v733 = vsel %vm731, %v724, %v625
      %v734 = vsel %vm731, %v725, %v627
      %v735 = vsel %vm731, %v726, %v629
      %v736 = vsel %vm731, %v727, %v631
      %v737 = vsel %vm731, %v728, %v633
      %v738 = vsel %vm731, %v729, %v635
      %v739 = vsel %vm731, %v730, %v637
      %vm740 = vcmask 261120
      %v741 = vsel %vm740, %v732, %v655
      %v742 = vsel %vm740, %v733, %v657
      %v743 = vsel %vm740, %v734, %v659
      %v744 = vsel %vm740, %v735, %v661
      %v745 = vsel %vm740, %v736, %v663
      %v746 = vsel %vm740, %v737, %v665
      %v747 = vsel %vm740, %v738, %v667
      %v748 = vsel %vm740, %v739, %v669
      %v749 = vld [vmem:[%s1] sm:$0xff]
      %v750 = vld [vmem:[%s1 + $0x8] sm:$0xff]
      %v751 = vld [vmem:[%s1 + $0x10] sm:$0xff]
      %v752 = vld [vmem:[%s1 + $0x18] sm:$0xff]
      %v753 = vld [vmem:[%s1 + $0x20] sm:$0xf]
      %v754 = vld [vmem:[%s2] sm:$0x1]
      %v756 = vlaneseq
      %v757 = vshrl.u32 %v756, 7
      %v758 = vsub.s32 0, %v757
      %v759 = vrot.slane %v754, %v758
      %vm761 = vcmask 293888
      %v763 = vsel %vm761, %v741, 0
      %v766 = vsel %vm761, %v742, 0
      %v769 = vsel %vm761, %v743, 0
      %v772 = vsel %vm761, %v744, 0
      %v775 = vsel %vm761, %v745, 0
      %v778 = vsel %vm761, %v746, 0
      %v781 = vsel %vm761, %v747, 0
      %v784 = vsel %vm761, %v748, 0
      %vm786 = vcmask 1043456
      %v788 = vsel %vm786, %v753, 0
      %790 = vmatprep.subr.mxu0 0.0
      %791 = vmatpush1.msra.mxu0 %v749
      %792 = vmatprep.subr.mxu0 0.0
      %793 = vmatpush1.msra.mxu0 %v750
      %794 = vmatprep.subr.mxu0 0.0
      %795 = vmatpush1.msra.mxu0 %v751
      %796 = vmatprep.subr.mxu0 0.0
      %797 = vmatpush1.msra.mxu0 %v752
      %798 = vmatprep.subr.mxu0 0.0
      %799 = vmatpush1.msra.mxu0 %v788
      %800 = vmatprep.subr.mxu0 0.0
      %801 = vmatpush1.msra.mxu0 0.0
      %802 = vmatprep.subr.mxu0 0.0
      %803 = vmatpush1.msra.mxu0 0.0
      %804 = vmatprep.subr.mxu0 0.0
      %805 = vmatpush1.msra.mxu0 0.0
      %806 = vmatprep.subr.mxu0 0.0
      %807 = vmatpush1.msra.mxu0 0.0
      %808 = vmatprep.subr.mxu0 0.0
      %809 = vmatpush1.msra.mxu0 0.0
      %810 = vmatprep.subr.mxu0 0.0
      %811 = vmatpush1.msra.mxu0 0.0
      %812 = vmatprep.subr.mxu0 0.0
      %813 = vmatpush1.msra.mxu0 0.0
      %814 = vmatprep.subr.mxu0 0.0
      %815 = vmatpush1.msra.mxu0 0.0
      %816 = vmatprep.subr.mxu0 0.0
      %817 = vmatpush1.msra.mxu0 0.0
      %818 = vmatprep.subr.mxu0 0.0
      %819 = vmatpush1.msra.mxu0 0.0
      %820 = vmatprep.subr.mxu0 0.0
      %821 = vmatpush1.msra.mxu0 0.0
      %822 = vmatprep.subr.mxu0 0.0
      %823 = vmatpush1.msra.mxu0 0.0
      %824 = vmatprep.subr.mxu0 0.0
      %825 = vmatpush1.msra.mxu0 0.0
      %826 = vmatprep.subr.mxu0 0.0
      %827 = vmatpush1.msra.mxu0 0.0
      %828 = vmatprep.subr.mxu0 0.0
      %829 = vmatpush1.msra.mxu0 0.0
      %830 = vmatprep.subr.mxu0 0.0
      %831 = vmatpush1.msra.mxu0 0.0
      %832 = vmatprep.subr.mxu0 0.0
      %833 = vmatpush1.msra.mxu0 0.0
      %834 = vmatprep.subr.mxu0 0.0
      %835 = vmatpush1.msra.mxu0 0.0
      %836 = vmatprep.subr.mxu0 0.0
      %837 = vmatpush1.msra.mxu0 0.0
      %838 = vmatprep.subr.mxu0 0.0
      %839 = vmatpush1.msra.mxu0 0.0
      %840 = vmatprep.subr.mxu0 0.0
      %841 = vmatpush1.msra.mxu0 0.0
      %842 = vmatprep.subr.mxu0 0.0
      %843 = vmatpush1.msra.mxu0 0.0
      %844 = vmatprep.subr.mxu0 0.0
      %845 = vmatpush1.msra.mxu0 0.0
      %846 = vmatprep.subr.mxu0 0.0
      %847 = vmatpush1.msra.mxu0 0.0
      %848 = vmatprep.subr.mxu0 0.0
      %849 = vmatpush1.msra.mxu0 0.0
      %850 = vmatprep.subr.mxu0 0.0
      %851 = vmatpush1.msra.mxu0 0.0
      %852 = vmatprep.subr.mxu0 0.0
      %853 = vmatpush1.msra.mxu0 0.0
      %854 = vmatprep.mubr.f32.mxu0 0.0
      %855 = vmatmul.mubr.f32.gmra.mrb[0].mxu0 %v763
      %v856 = vpop.f32.mrb[0].mxu0
      %v857 = vadd.f32 %v759, %v856
      %v858 = vpop.f32.mrb[0].mxu0
      %859 = vmatprep.mubr.f32.mxu0 0.0
      %860 = vmatmul.mubr.f32.gmra.mrb[0].mxu0 %v766
      %v861 = vpop.f32.mrb[0].mxu0
      %v862 = vadd.f32 %v759, %v861
      %v863 = vpop.f32.mrb[0].mxu0
      %864 = vmatprep.mubr.f32.mxu0 0.0
      %865 = vmatmul.mubr.f32.gmra.mrb[0].mxu0 %v769
      %v866 = vpop.f32.mrb[0].mxu0
      %v867 = vadd.f32 %v759, %v866
      %v868 = vpop.f32.mrb[0].mxu0
      %869 = vmatprep.mubr.f32.mxu0 0.0
      %870 = vmatmul.mubr.f32.gmra.mrb[0].mxu0 %v772
      %v871 = vpop.f32.mrb[0].mxu0
      %v872 = vadd.f32 %v759, %v871
      %v873 = vpop.f32.mrb[0].mxu0
      %874 = vmatprep.mubr.f32.mxu0 0.0
      %875 = vmatmul.mubr.f32.gmra.mrb[0].mxu0 %v775
      %v876 = vpop.f32.mrb[0].mxu0
      %v877 = vadd.f32 %v759, %v876
      %v878 = vpop.f32.mrb[0].mxu0
      %879 = vmatprep.mubr.f32.mxu0 0.0
      %880 = vmatmul.mubr.f32.gmra.mrb[0].mxu0 %v778
      %v881 = vpop.f32.mrb[0].mxu0
      %v882 = vadd.f32 %v759, %v881
      %v883 = vpop.f32.mrb[0].mxu0
      %884 = vmatprep.mubr.f32.mxu0 0.0
      %885 = vmatmul.mubr.f32.gmra.mrb[0].mxu0 %v781
      %v886 = vpop.f32.mrb[0].mxu0
      %v887 = vadd.f32 %v759, %v886
      %v888 = vpop.f32.mrb[0].mxu0
      %889 = vmatprep.mubr.f32.mxu0 0.0
      %890 = vmatmul.mubr.f32.gmra.mrb[0].mxu0 %v784
      %v891 = vpop.f32.mrb[0].mxu0
      %v892 = vadd.f32 %v759, %v891
      %v893 = vpop.f32.mrb[0].mxu0
      %894 = vdwg.mxu0
      %v895 = vmax.f32 %v857, 0.0
      %v896 = vmax.f32 %v862, 0.0
      %v897 = vmax.f32 %v867, 0.0
      %v898 = vmax.f32 %v872, 0.0
      %v899 = vmax.f32 %v877, 0.0
      %v900 = vmax.f32 %v882, 0.0
      %v901 = vmax.f32 %v887, 0.0
      %v902 = vmax.f32 %v892, 0.0
      %903 = vst.msk [vmem:[#allocation3] sm:$0xff] %vm686, 0.0
      %vm904 = vcmask 58368
      %905 = vst.msk [vmem:[#allocation3 + $0x8] sm:$0x3] %vm904, 0.0
      %s906 = scalar_lea.vmem [#allocation3], 144
      %907 = vst.msk [vmem:[%s906] sm:$0xff] %vm686, 0.0
      %908 = vst.msk [vmem:[%s906 + $0x8] sm:$0x3] %vm904, 0.0
      %vm909 = vcmask 57344
      %910 = vst.msk [vmem:[#allocation3] sm:$0x1] %vm909, 0.0
      %911 = vst.msk [vmem:[#allocation3 + $0x10] sm:$0x1] %vm909, 0.0
      %912 = vst.msk [vmem:[#allocation3 + $0x20] sm:$0x1] %vm909, 0.0
      %913 = vst.msk [vmem:[#allocation3 + $0x30] sm:$0x1] %vm909, 0.0
      %914 = vst.msk [vmem:[#allocation3 + $0x40] sm:$0x1] %vm909, 0.0
      %915 = vst.msk [vmem:[#allocation3 + $0x50] sm:$0x1] %vm909, 0.0
      %916 = vst.msk [vmem:[#allocation3 + $0x60] sm:$0x1] %vm909, 0.0
      %917 = vst.msk [vmem:[#allocation3 + $0x70] sm:$0x1] %vm909, 0.0
      %918 = vst.msk [vmem:[#allocation3 + $0x80] sm:$0x1] %vm909, 0.0
      %919 = vst.msk [vmem:[#allocation3 + $0x90] sm:$0x1] %vm909, 0.0
      %920 = vst.msk [vmem:[#allocation3 + $0x9] sm:$0x1] %vm909, 0.0
      %921 = vst.msk [vmem:[#allocation3 + $0x19] sm:$0x1] %vm909, 0.0
      %922 = vst.msk [vmem:[#allocation3 + $0x29] sm:$0x1] %vm909, 0.0
      %923 = vst.msk [vmem:[#allocation3 + $0x39] sm:$0x1] %vm909, 0.0
      %924 = vst.msk [vmem:[#allocation3 + $0x49] sm:$0x1] %vm909, 0.0
      %925 = vst.msk [vmem:[#allocation3 + $0x59] sm:$0x1] %vm909, 0.0
      %926 = vst.msk [vmem:[#allocation3 + $0x69] sm:$0x1] %vm909, 0.0
      %927 = vst.msk [vmem:[#allocation3 + $0x79] sm:$0x1] %vm909, 0.0
      %928 = vst.msk [vmem:[#allocation3 + $0x89] sm:$0x1] %vm909, 0.0
      %929 = vst.msk [vmem:[#allocation3 + $0x99] sm:$0x1] %vm909, 0.0
      %s930 = scalar_lea.vmem [#allocation3], 16
      %931 = vst.msk [vmem:[%s930 + $0x1] sm:$0xff] %vm686, %v895
      %932 = vst.msk [vmem:[%s930 + $0x11] sm:$0xff] %vm686, %v896
      %933 = vst.msk [vmem:[%s930 + $0x21] sm:$0xff] %vm686, %v897
      %934 = vst.msk [vmem:[%s930 + $0x31] sm:$0xff] %vm686, %v898
      %935 = vst.msk [vmem:[%s930 + $0x41] sm:$0xff] %vm686, %v899
      %936 = vst.msk [vmem:[%s930 + $0x51] sm:$0xff] %vm686, %v900
      %937 = vst.msk [vmem:[%s930 + $0x61] sm:$0xff] %vm686, %v901
      %938 = vst.msk [vmem:[%s930 + $0x71] sm:$0xff] %vm686, %v902
      %v939 = vld [vmem:[#allocation3] sm:$0xff]
      %v940 = vld [vmem:[#allocation3 + $0x10] sm:$0xff]
      %v941 = vld [vmem:[#allocation3 + $0x20] sm:$0xff]
      %v942 = vld [vmem:[#allocation3 + $0x30] sm:$0xff]
      %v943 = vld [vmem:[#allocation3 + $0x40] sm:$0xff]
      %v944 = vld [vmem:[#allocation3 + $0x50] sm:$0xff]
      %v945 = vld [vmem:[#allocation3 + $0x60] sm:$0xff]
      %v946 = vld [vmem:[#allocation3 + $0x70] sm:$0xff]
      %v947 = vld [vmem:[#allocation3 + $0x1] sm:$0xff]
      %v948 = vld [vmem:[#allocation3 + $0x11] sm:$0xff]
      %v949 = vld [vmem:[#allocation3 + $0x21] sm:$0xff]
      %v950 = vld [vmem:[#allocation3 + $0x31] sm:$0xff]
      %v951 = vld [vmem:[#allocation3 + $0x41] sm:$0xff]
      %v952 = vld [vmem:[#allocation3 + $0x51] sm:$0xff]
      %v953 = vld [vmem:[#allocation3 + $0x61] sm:$0xff]
      %v954 = vld [vmem:[#allocation3 + $0x71] sm:$0xff]
      %v955 = vld [vmem:[#allocation3 + $0x2] sm:$0xff]
      %v956 = vld [vmem:[#allocation3 + $0x12] sm:$0xff]
      %v957 = vld [vmem:[#allocation3 + $0x22] sm:$0xff]
      %v958 = vld [vmem:[#allocation3 + $0x32] sm:$0xff]
      %v959 = vld [vmem:[#allocation3 + $0x42] sm:$0xff]
      %v960 = vld [vmem:[#allocation3 + $0x52] sm:$0xff]
      %v961 = vld [vmem:[#allocation3 + $0x62] sm:$0xff]
      %v962 = vld [vmem:[#allocation3 + $0x72] sm:$0xff]
      %v963 = vld [vmem:[%s930] sm:$0xff]
      %v964 = vld [vmem:[%s930 + $0x10] sm:$0xff]
      %v965 = vld [vmem:[%s930 + $0x20] sm:$0xff]
      %v966 = vld [vmem:[%s930 + $0x30] sm:$0xff]
      %v967 = vld [vmem:[%s930 + $0x40] sm:$0xff]
      %v968 = vld [vmem:[%s930 + $0x50] sm:$0xff]
      %v969 = vld [vmem:[%s930 + $0x60] sm:$0xff]
      %v970 = vld [vmem:[%s930 + $0x70] sm:$0xff]
      %v971 = vld [vmem:[%s930 + $0x1] sm:$0xff]
      %v972 = vld [vmem:[%s930 + $0x11] sm:$0xff]
      %v973 = vld [vmem:[%s930 + $0x21] sm:$0xff]
      %v974 = vld [vmem:[%s930 + $0x31] sm:$0xff]
      %v975 = vld [vmem:[%s930 + $0x41] sm:$0xff]
      %v976 = vld [vmem:[%s930 + $0x51] sm:$0xff]
      %v977 = vld [vmem:[%s930 + $0x61] sm:$0xff]
      %v978 = vld [vmem:[%s930 + $0x71] sm:$0xff]
      %v979 = vld [vmem:[%s930 + $0x2] sm:$0xff]
      %v980 = vld [vmem:[%s930 + $0x12] sm:$0xff]
      %v981 = vld [vmem:[%s930 + $0x22] sm:$0xff]
      %v982 = vld [vmem:[%s930 + $0x32] sm:$0xff]
      %v983 = vld [vmem:[%s930 + $0x42] sm:$0xff]
      %v984 = vld [vmem:[%s930 + $0x52] sm:$0xff]
      %v985 = vld [vmem:[%s930 + $0x62] sm:$0xff]
      %v986 = vld [vmem:[%s930 + $0x72] sm:$0xff]
      %s987 = scalar_lea.vmem [#allocation3], 32
      %v988 = vld [vmem:[%s987] sm:$0xff]
      %v989 = vld [vmem:[%s987 + $0x10] sm:$0xff]
      %v990 = vld [vmem:[%s987 + $0x20] sm:$0xff]
      %v991 = vld [vmem:[%s987 + $0x30] sm:$0xff]
      %v992 = vld [vmem:[%s987 + $0x40] sm:$0xff]
      %v993 = vld [vmem:[%s987 + $0x50] sm:$0xff]
      %v994 = vld [vmem:[%s987 + $0x60] sm:$0xff]
      %v995 = vld [vmem:[%s987 + $0x70] sm:$0xff]
      %v996 = vld [vmem:[%s987 + $0x1] sm:$0xff]
      %v997 = vld [vmem:[%s987 + $0x11] sm:$0xff]
      %v998 = vld [vmem:[%s987 + $0x21] sm:$0xff]
      %v999 = vld [vmem:[%s987 + $0x31] sm:$0xff]
      %v1000 = vld [vmem:[%s987 + $0x41] sm:$0xff]
      %v1001 = vld [vmem:[%s987 + $0x51] sm:$0xff]
      %v1002 = vld [vmem:[%s987 + $0x61] sm:$0xff]
      %v1003 = vld [vmem:[%s987 + $0x71] sm:$0xff]
      %v1004 = vld [vmem:[%s987 + $0x2] sm:$0xff]
      %v1005 = vld [vmem:[%s987 + $0x12] sm:$0xff]
      %v1006 = vld [vmem:[%s987 + $0x22] sm:$0xff]
      %v1007 = vld [vmem:[%s987 + $0x32] sm:$0xff]
      %v1008 = vld [vmem:[%s987 + $0x42] sm:$0xff]
      %v1009 = vld [vmem:[%s987 + $0x52] sm:$0xff]
      %v1010 = vld [vmem:[%s987 + $0x62] sm:$0xff]
      %v1011 = vld [vmem:[%s987 + $0x72] sm:$0xff]
      %1020 = vrot.lane.b32.xlu0 %v947, 8
      %v1021 = vpop.permute.xlu0 %1020
      %1022 = vrot.lane.b32.xlu0 %v948, 8
      %v1023 = vpop.permute.xlu0 %1022
      %1024 = vrot.lane.b32.xlu0 %v949, 8
      %v1025 = vpop.permute.xlu0 %1024
      %1026 = vrot.lane.b32.xlu0 %v950, 8
      %v1027 = vpop.permute.xlu0 %1026
      %1028 = vrot.lane.b32.xlu0 %v951, 8
      %v1029 = vpop.permute.xlu0 %1028
      %1030 = vrot.lane.b32.xlu0 %v952, 8
      %v1031 = vpop.permute.xlu0 %1030
      %1032 = vrot.lane.b32.xlu0 %v953, 8
      %v1033 = vpop.permute.xlu0 %1032
      %1034 = vrot.lane.b32.xlu0 %v954, 8
      %v1035 = vpop.permute.xlu0 %1034
      %1052 = vrot.lane.b32.xlu0 %v955, 16
      %v1053 = vpop.permute.xlu0 %1052
      %1054 = vrot.lane.b32.xlu0 %v956, 16
      %v1055 = vpop.permute.xlu0 %1054
      %1056 = vrot.lane.b32.xlu0 %v957, 16
      %v1057 = vpop.permute.xlu0 %1056
      %1058 = vrot.lane.b32.xlu0 %v958, 16
      %v1059 = vpop.permute.xlu0 %1058
      %1060 = vrot.lane.b32.xlu0 %v959, 16
      %v1061 = vpop.permute.xlu0 %1060
      %1062 = vrot.lane.b32.xlu0 %v960, 16
      %v1063 = vpop.permute.xlu0 %1062
      %1064 = vrot.lane.b32.xlu0 %v961, 16
      %v1065 = vpop.permute.xlu0 %1064
      %1066 = vrot.lane.b32.xlu0 %v962, 16
      %v1067 = vpop.permute.xlu0 %1066
      %1084 = vrot.lane.b32.xlu0 %v963, 24
      %v1085 = vpop.permute.xlu0 %1084
      %1086 = vrot.lane.b32.xlu0 %v964, 24
      %v1087 = vpop.permute.xlu0 %1086
      %1088 = vrot.lane.b32.xlu0 %v965, 24
      %v1089 = vpop.permute.xlu0 %1088
      %1090 = vrot.lane.b32.xlu0 %v966, 24
      %v1091 = vpop.permute.xlu0 %1090
      %1092 = vrot.lane.b32.xlu0 %v967, 24
      %v1093 = vpop.permute.xlu0 %1092
      %1094 = vrot.lane.b32.xlu0 %v968, 24
      %v1095 = vpop.permute.xlu0 %1094
      %1096 = vrot.lane.b32.xlu0 %v969, 24
      %v1097 = vpop.permute.xlu0 %1096
      %1098 = vrot.lane.b32.xlu0 %v970, 24
      %v1099 = vpop.permute.xlu0 %1098
      %1116 = vrot.lane.b32.xlu0 %v971, 32
      %v1117 = vpop.permute.xlu0 %1116
      %1118 = vrot.lane.b32.xlu0 %v972, 32
      %v1119 = vpop.permute.xlu0 %1118
      %1120 = vrot.lane.b32.xlu0 %v973, 32
      %v1121 = vpop.permute.xlu0 %1120
      %1122 = vrot.lane.b32.xlu0 %v974, 32
      %v1123 = vpop.permute.xlu0 %1122
      %1124 = vrot.lane.b32.xlu0 %v975, 32
      %v1125 = vpop.permute.xlu0 %1124
      %1126 = vrot.lane.b32.xlu0 %v976, 32
      %v1127 = vpop.permute.xlu0 %1126
      %1128 = vrot.lane.b32.xlu0 %v977, 32
      %v1129 = vpop.permute.xlu0 %1128
      %1130 = vrot.lane.b32.xlu0 %v978, 32
      %v1131 = vpop.permute.xlu0 %1130
      %1148 = vrot.lane.b32.xlu0 %v979, 40
      %v1149 = vpop.permute.xlu0 %1148
      %1150 = vrot.lane.b32.xlu0 %v980, 40
      %v1151 = vpop.permute.xlu0 %1150
      %1152 = vrot.lane.b32.xlu0 %v981, 40
      %v1153 = vpop.permute.xlu0 %1152
      %1154 = vrot.lane.b32.xlu0 %v982, 40
      %v1155 = vpop.permute.xlu0 %1154
      %1156 = vrot.lane.b32.xlu0 %v983, 40
      %v1157 = vpop.permute.xlu0 %1156
      %1158 = vrot.lane.b32.xlu0 %v984, 40
      %v1159 = vpop.permute.xlu0 %1158
      %1160 = vrot.lane.b32.xlu0 %v985, 40
      %v1161 = vpop.permute.xlu0 %1160
      %1162 = vrot.lane.b32.xlu0 %v986, 40
      %v1163 = vpop.permute.xlu0 %1162
      %1180 = vrot.lane.b32.xlu0 %v988, 48
      %v1181 = vpop.permute.xlu0 %1180
      %1182 = vrot.lane.b32.xlu0 %v989, 48
      %v1183 = vpop.permute.xlu0 %1182
      %1184 = vrot.lane.b32.xlu0 %v990, 48
      %v1185 = vpop.permute.xlu0 %1184
      %1186 = vrot.lane.b32.xlu0 %v991, 48
      %v1187 = vpop.permute.xlu0 %1186
      %1188 = vrot.lane.b32.xlu0 %v992, 48
      %v1189 = vpop.permute.xlu0 %1188
      %1190 = vrot.lane.b32.xlu0 %v993, 48
      %v1191 = vpop.permute.xlu0 %1190
      %1192 = vrot.lane.b32.xlu0 %v994, 48
      %v1193 = vpop.permute.xlu0 %1192
      %1194 = vrot.lane.b32.xlu0 %v995, 48
      %v1195 = vpop.permute.xlu0 %1194
      %1212 = vrot.lane.b32.xlu0 %v996, 56
      %v1213 = vpop.permute.xlu0 %1212
      %1214 = vrot.lane.b32.xlu0 %v997, 56
      %v1215 = vpop.permute.xlu0 %1214
      %1216 = vrot.lane.b32.xlu0 %v998, 56
      %v1217 = vpop.permute.xlu0 %1216
      %1218 = vrot.lane.b32.xlu0 %v999, 56
      %v1219 = vpop.permute.xlu0 %1218
      %1220 = vrot.lane.b32.xlu0 %v1000, 56
      %v1221 = vpop.permute.xlu0 %1220
      %1222 = vrot.lane.b32.xlu0 %v1001, 56
      %v1223 = vpop.permute.xlu0 %1222
      %1224 = vrot.lane.b32.xlu0 %v1002, 56
      %v1225 = vpop.permute.xlu0 %1224
      %1226 = vrot.lane.b32.xlu0 %v1003, 56
      %v1227 = vpop.permute.xlu0 %1226
      %1244 = vrot.lane.b32.xlu0 %v1004, 64
      %v1245 = vpop.permute.xlu0 %1244
      %1246 = vrot.lane.b32.xlu0 %v1005, 64
      %v1247 = vpop.permute.xlu0 %1246
      %1248 = vrot.lane.b32.xlu0 %v1006, 64
      %v1249 = vpop.permute.xlu0 %1248
      %1250 = vrot.lane.b32.xlu0 %v1007, 64
      %v1251 = vpop.permute.xlu0 %1250
      %1252 = vrot.lane.b32.xlu0 %v1008, 64
      %v1253 = vpop.permute.xlu0 %1252
      %1254 = vrot.lane.b32.xlu0 %v1009, 64
      %v1255 = vpop.permute.xlu0 %1254
      %1256 = vrot.lane.b32.xlu0 %v1010, 64
      %v1257 = vpop.permute.xlu0 %1256
      %1258 = vrot.lane.b32.xlu0 %v1011, 64
      %v1259 = vpop.permute.xlu0 %1258
      %v1268 = vsel %vm686, %v939, %v1021
      %v1269 = vsel %vm686, %v940, %v1023
      %v1270 = vsel %vm686, %v941, %v1025
      %v1271 = vsel %vm686, %v942, %v1027
      %v1272 = vsel %vm686, %v943, %v1029
      %v1273 = vsel %vm686, %v944, %v1031
      %v1274 = vsel %vm686, %v945, %v1033
      %v1275 = vsel %vm686, %v946, %v1035
      %v1276 = vsel %vm704, %v1268, %v1053
      %v1277 = vsel %vm704, %v1269, %v1055
      %v1278 = vsel %vm704, %v1270, %v1057
      %v1279 = vsel %vm704, %v1271, %v1059
      %v1280 = vsel %vm704, %v1272, %v1061
      %v1281 = vsel %vm704, %v1273, %v1063
      %v1282 = vsel %vm704, %v1274, %v1065
      %v1283 = vsel %vm704, %v1275, %v1067
      %v1284 = vsel %vm722, %v1276, %v1085
      %v1285 = vsel %vm722, %v1277, %v1087
      %v1286 = vsel %vm722, %v1278, %v1089
      %v1287 = vsel %vm722, %v1279, %v1091
      %v1288 = vsel %vm722, %v1280, %v1093
      %v1289 = vsel %vm722, %v1281, %v1095
      %v1290 = vsel %vm722, %v1282, %v1097
      %v1291 = vsel %vm722, %v1283, %v1099
      %v1292 = vsel %vm740, %v1284, %v1117
      %v1293 = vsel %vm740, %v1285, %v1119
      %v1294 = vsel %vm740, %v1286, %v1121
      %v1295 = vsel %vm740, %v1287, %v1123
      %v1296 = vsel %vm740, %v1288, %v1125
      %v1297 = vsel %vm740, %v1289, %v1127
      %v1298 = vsel %vm740, %v1290, %v1129
      %v1299 = vsel %vm740, %v1291, %v1131
      %vm1300 = vcmask 326656
      %v1301 = vsel %vm1300, %v1292, %v1149
      %v1302 = vsel %vm1300, %v1293, %v1151
      %v1303 = vsel %vm1300, %v1294, %v1153
      %v1304 = vsel %vm1300, %v1295, %v1155
      %v1305 = vsel %vm1300, %v1296, %v1157
      %v1306 = vsel %vm1300, %v1297, %v1159
      %v1307 = vsel %vm1300, %v1298, %v1161
      %v1308 = vsel %vm1300, %v1299, %v1163
      %vm1309 = vcmask 392192
      %v1310 = vsel %vm1309, %v1301, %v1181
      %v1311 = vsel %vm1309, %v1302, %v1183
      %v1312 = vsel %vm1309, %v1303, %v1185
      %v1313 = vsel %vm1309, %v1304, %v1187
      %v1314 = vsel %vm1309, %v1305, %v1189
      %v1315 = vsel %vm1309, %v1306, %v1191
      %v1316 = vsel %vm1309, %v1307, %v1193
      %v1317 = vsel %vm1309, %v1308, %v1195
      %vm1318 = vcmask 457728
      %v1319 = vsel %vm1318, %v1310, %v1213
      %v1320 = vsel %vm1318, %v1311, %v1215
      %v1321 = vsel %vm1318, %v1312, %v1217
      %v1322 = vsel %vm1318, %v1313, %v1219
      %v1323 = vsel %vm1318, %v1314, %v1221
      %v1324 = vsel %vm1318, %v1315, %v1223
      %v1325 = vsel %vm1318, %v1316, %v1225
      %v1326 = vsel %vm1318, %v1317, %v1227
      %vm1327 = vcmask 523264
      %v1328 = vsel %vm1327, %v1319, %v1245
      %v1329 = vsel %vm1327, %v1320, %v1247
      %v1330 = vsel %vm1327, %v1321, %v1249
      %v1331 = vsel %vm1327, %v1322, %v1251
      %v1332 = vsel %vm1327, %v1323, %v1253
      %v1333 = vsel %vm1327, %v1324, %v1255
      %v1334 = vsel %vm1327, %v1325, %v1257
      %v1335 = vsel %vm1327, %v1326, %v1259
      %v1336 = vld [vmem:[%s3] sm:$0xff]
      %v1337 = vld [vmem:[%s3 + $0x8] sm:$0xff]
      %v1338 = vld [vmem:[%s3 + $0x10] sm:$0xff]
      %v1339 = vld [vmem:[%s3 + $0x18] sm:$0xff]
      %v1340 = vld [vmem:[%s3 + $0x20] sm:$0xff]
      %v1341 = vld [vmem:[%s3 + $0x28] sm:$0xff]
      %v1342 = vld [vmem:[%s3 + $0x30] sm:$0xff]
      %v1343 = vld [vmem:[%s3 + $0x38] sm:$0xff]
      %v1344 = vld [vmem:[%s3 + $0x40] sm:$0xff]
      %v1345 = vld [vmem:[%s4] sm:$0x1]
      %v1347 = vlaneseq
      %v1348 = vshrl.u32 %v1347, 7
      %v1349 = vsub.s32 0, %v1348
      %v1350 = vrot.slane %v1345, %v1349
      %vm1352 = vcmask 588800
      %v1354 = vsel %vm1352, %v1328, 0
      %v1357 = vsel %vm1352, %v1329, 0
      %v1360 = vsel %vm1352, %v1330, 0
      %v1363 = vsel %vm1352, %v1331, 0
      %v1366 = vsel %vm1352, %v1332, 0
      %v1369 = vsel %vm1352, %v1333, 0
      %v1372 = vsel %vm1352, %v1334, 0
      %v1375 = vsel %vm1352, %v1335, 0
      %1377 = vmatprep.subr.mxu0 0.0
      %1378 = vmatpush1.msra.mxu0 %v1336
      %1379 = vmatprep.subr.mxu0 0.0
      %1380 = vmatpush1.msra.mxu0 %v1337
      %1381 = vmatprep.subr.mxu0 0.0
      %1382 = vmatpush1.msra.mxu0 %v1338
      %1383 = vmatprep.subr.mxu0 0.0
      %1384 = vmatpush1.msra.mxu0 %v1339
      %1385 = vmatprep.subr.mxu0 0.0
      %1386 = vmatpush1.msra.mxu0 %v1340
      %1387 = vmatprep.subr.mxu0 0.0
      %1388 = vmatpush1.msra.mxu0 %v1341
      %1389 = vmatprep.subr.mxu0 0.0
      %1390 = vmatpush1.msra.mxu0 %v1342
      %1391 = vmatprep.subr.mxu0 0.0
      %1392 = vmatpush1.msra.mxu0 %v1343
      %1393 = vmatprep.subr.mxu0 0.0
      %1394 = vmatpush1.msra.mxu0 %v1344
      %1395 = vmatprep.subr.mxu0 0.0
      %1396 = vmatpush1.msra.mxu0 0.0
      %1397 = vmatprep.subr.mxu0 0.0
      %1398 = vmatpush1.msra.mxu0 0.0
      %1399 = vmatprep.subr.mxu0 0.0
      %1400 = vmatpush1.msra.mxu0 0.0
      %1401 = vmatprep.subr.mxu0 0.0
      %1402 = vmatpush1.msra.mxu0 0.0
      %1403 = vmatprep.subr.mxu0 0.0
      %1404 = vmatpush1.msra.mxu0 0.0
      %1405 = vmatprep.subr.mxu0 0.0
      %1406 = vmatpush1.msra.mxu0 0.0
      %1407 = vmatprep.subr.mxu0 0.0
      %1408 = vmatpush1.msra.mxu0 0.0
      %1409 = vmatprep.subr.mxu0 0.0
      %1410 = vmatpush1.msra.mxu0 0.0
      %1411 = vmatprep.subr.mxu0 0.0
      %1412 = vmatpush1.msra.mxu0 0.0
      %1413 = vmatprep.subr.mxu0 0.0
      %1414 = vmatpush1.msra.mxu0 0.0
      %1415 = vmatprep.subr.mxu0 0.0
      %1416 = vmatpush1.msra.mxu0 0.0
      %1417 = vmatprep.subr.mxu0 0.0
      %1418 = vmatpush1.msra.mxu0 0.0
      %1419 = vmatprep.subr.mxu0 0.0
      %1420 = vmatpush1.msra.mxu0 0.0
      %1421 = vmatprep.subr.mxu0 0.0
      %1422 = vmatpush1.msra.mxu0 0.0
      %1423 = vmatprep.subr.mxu0 0.0
      %1424 = vmatpush1.msra.mxu0 0.0
      %1425 = vmatprep.subr.mxu0 0.0
      %1426 = vmatpush1.msra.mxu0 0.0
      %1427 = vmatprep.subr.mxu0 0.0
      %1428 = vmatpush1.msra.mxu0 0.0
      %1429 = vmatprep.subr.mxu0 0.0
      %1430 = vmatpush1.msra.mxu0 0.0
      %1431 = vmatprep.subr.mxu0 0.0
      %1432 = vmatpush1.msra.mxu0 0.0
      %1433 = vmatprep.subr.mxu0 0.0
      %1434 = vmatpush1.msra.mxu0 0.0
      %1435 = vmatprep.subr.mxu0 0.0
      %1436 = vmatpush1.msra.mxu0 0.0
      %1437 = vmatprep.subr.mxu0 0.0
      %1438 = vmatpush1.msra.mxu0 0.0
      %1439 = vmatprep.subr.mxu0 0.0
      %1440 = vmatpush1.msra.mxu0 0.0
      %1441 = vmatprep.mubr.f32.mxu0 0.0
      %1442 = vmatmul.mubr.f32.gmra.mrb[0].mxu0 %v1354
      %v1443 = vpop.f32.mrb[0].mxu0
      %v1444 = vadd.f32 %v1350, %v1443
      %v1445 = vpop.f32.mrb[0].mxu0
      %1446 = vmatprep.mubr.f32.mxu0 0.0
      %1447 = vmatmul.mubr.f32.gmra.mrb[0].mxu0 %v1357
      %v1448 = vpop.f32.mrb[0].mxu0
      %v1449 = vadd.f32 %v1350, %v1448
      %v1450 = vpop.f32.mrb[0].mxu0
      %1451 = vmatprep.mubr.f32.mxu0 0.0
      %1452 = vmatmul.mubr.f32.gmra.mrb[0].mxu0 %v1360
      %v1453 = vpop.f32.mrb[0].mxu0
      %v1454 = vadd.f32 %v1350, %v1453
      %v1455 = vpop.f32.mrb[0].mxu0
      %1456 = vmatprep.mubr.f32.mxu0 0.0
      %1457 = vmatmul.mubr.f32.gmra.mrb[0].mxu0 %v1363
      %v1458 = vpop.f32.mrb[0].mxu0
      %v1459 = vadd.f32 %v1350, %v1458
      %v1460 = vpop.f32.mrb[0].mxu0
      %1461 = vmatprep.mubr.f32.mxu0 0.0
      %1462 = vmatmul.mubr.f32.gmra.mrb[0].mxu0 %v1366
      %v1463 = vpop.f32.mrb[0].mxu0
      %v1464 = vadd.f32 %v1350, %v1463
      %v1465 = vpop.f32.mrb[0].mxu0
      %1466 = vmatprep.mubr.f32.mxu0 0.0
      %1467 = vmatmul.mubr.f32.gmra.mrb[0].mxu0 %v1369
      %v1468 = vpop.f32.mrb[0].mxu0
      %v1469 = vadd.f32 %v1350, %v1468
      %v1470 = vpop.f32.mrb[0].mxu0
      %1471 = vmatprep.mubr.f32.mxu0 0.0
      %1472 = vmatmul.mubr.f32.gmra.mrb[0].mxu0 %v1372
      %v1473 = vpop.f32.mrb[0].mxu0
      %v1474 = vadd.f32 %v1350, %v1473
      %v1475 = vpop.f32.mrb[0].mxu0
      %1476 = vmatprep.mubr.f32.mxu0 0.0
      %1477 = vmatmul.mubr.f32.gmra.mrb[0].mxu0 %v1375
      %v1478 = vpop.f32.mrb[0].mxu0
      %v1479 = vadd.f32 %v1350, %v1478
      %v1480 = vpop.f32.mrb[0].mxu0
      %1481 = vdwg.mxu0
      %v1482 = vmax.f32 %v1444, 0.0
      %v1483 = vmax.f32 %v1449, 0.0
      %v1484 = vmax.f32 %v1454, 0.0
      %v1485 = vmax.f32 %v1459, 0.0
      %v1486 = vmax.f32 %v1464, 0.0
      %v1487 = vmax.f32 %v1469, 0.0
      %v1488 = vmax.f32 %v1474, 0.0
      %v1489 = vmax.f32 %v1479, 0.0
      %1490 = vst.msk [vmem:[%s224] sm:$0xff] %vm686, %v1482
      %1491 = vst.msk [vmem:[%s224 + $0x8] sm:$0xff] %vm686, %v1483
      %1492 = vst.msk [vmem:[%s224 + $0x10] sm:$0xff] %vm686, %v1484
      %1493 = vst.msk [vmem:[%s224 + $0x18] sm:$0xff] %vm686, %v1485
      %1494 = vst.msk [vmem:[%s224 + $0x20] sm:$0xff] %vm686, %v1486
      %1495 = vst.msk [vmem:[%s224 + $0x28] sm:$0xff] %vm686, %v1487
      %1496 = vst.msk [vmem:[%s224 + $0x30] sm:$0xff] %vm686, %v1488
      %1497 = vst.msk [vmem:[%s224 + $0x38] sm:$0xff] %vm686, %v1489
      %p1498 = scmp.lt.s32.totalorder %s16, 1
      %s1499 = scalar_select %p1498, %s16, 1
      %s1500 = smul.addr %s1499, 8
      %s1501 = smul.addr %s1500, 8
      %s1502 = scalar_lea.vmem %s5, %s1501
      // Predicated region
      $region41: #{down_forward.1} parent=39 // pred_check
        %p1503 = pneg %p144
      $region42: #{down_forward.1} parent=39 // pred_check_branch
        %1505 = sbr.rel (%p1503) target = $region44
      $region43: #{down_forward.1} parent=39 // pred_region
        _
      $region44: #{down_forward.1} parent=39 // pred_fallthru
        _
    $region40: #{down_forward.1} parent=5 // pred_fallthru
      _
    %p1506 = scmp.le.s32.totalorder 2, %s11
    // Predicated region
    $region45: #{down_forward.1} parent=5 // pred_check
      %p1507 = pneg %p1506
    $region46: #{down_forward.1} parent=5 // pred_check_branch
      %1509 = sbr.rel (%p1507) target = $region48
    $region47: #{down_forward.1} parent=5 // pred_region
      %s1510 = ssub.s32 %s11, 2
      // Predicated region
      $region49: #{down_forward.1} parent=47 // pred_check
        %p1511 = pneg %p150
      $region50: #{down_forward.1} parent=47 // pred_check_branch
        %1513 = sbr.rel (%p1511) target = $region52
      $region51: #{down_forward.1} parent=47 // pred_region
        %p1514 = scmp.lt.s32.totalorder %s17, 1
        %s1515 = scalar_select %p1514, %s17, 1
        %s1516 = smul.addr %s1515, 8
        %s1517 = smul.addr %s1516, 8
        %s1518 = scalar_lea.vmem %s5, %s1517
      $region52: #{down_forward.1} parent=47 // pred_fallthru
        _
    $region48: #{down_forward.1} parent=5 // pred_fallthru
      _
  $region6: #{down_forward.1} parent=0 // loop_footer
    %s15 = sadd.s32 1, %s11
  $region7: #{down_forward.1} parent=0 // loop_footer_branch
    %10 = sbr.rel target = $region3
  $region8: #{down_forward.1} parent=0 // loop_exit
    _

</llo_original>
